<compile_context>
chip_gen: v7x
topology: tpu7x:2x2x1
jax: 0.10.0
libtpu: 0.0.40
codegen_flags: <defaults>
</compile_context>

<pallas_src>
import jax
import jax.numpy as jnp
from jax.experimental import pallas as pl
from jax.experimental.pallas import tpu as pltpu

D_EMB = 768          # per-embedding width
D_HID = 384          # hidden width of the first Linear
D_OUT = 2            # logical output width
D_OUT_PAD = 128      # lane-dense padded output width (sliced back to 2)
DEFAULT_TB = 2048    # max rows per grid step
ROW_ALIGN = 8        # sublane granularity for f32 activation tiles


def _round_up(x, m):
    return (x + m - 1) // m * m


def _mlp_head_kernel(e0_ref, e1_ref, w1a_ref, w1b_ref, b1_ref, w2_ref, b2_ref, o_ref):
    # e0/e1 : [TB, 768]  f32 activations (cast to bf16 here, not in the wrapper)
    # w1a/w1b: [768, 384] bf16 (split halves of W1^T)
    # b1    : [1, 384]   f32
    # w2    : [384, 128] bf16 (zero-padded from [384, 2])
    # b2    : [1, 128]   f32 (zero-padded)
    # o     : [TB, 128]  bf16
    e0 = e0_ref[...].astype(jnp.bfloat16)
    e1 = e1_ref[...].astype(jnp.bfloat16)
    h = jnp.dot(e0, w1a_ref[...], preferred_element_type=jnp.float32)
    h = h + jnp.dot(e1, w1b_ref[...], preferred_element_type=jnp.float32)
    h = jnp.maximum(h + b1_ref[...], 0.0)                        # bias + ReLU in f32
    logits = jnp.dot(h.astype(jnp.bfloat16), w2_ref[...],
                     preferred_element_type=jnp.float32) + b2_ref[...]
    o_ref[...] = jax.nn.sigmoid(logits).astype(o_ref.dtype)      # Sigmoid, bf16 store


def prepare_params(w1, b1, w2, b2):
    """One-time weight prep (hoisted out of the hot path).

    w1: [384, 1536], b1: [384], w2: [2, 384], b2: [2]  (PyTorch Linear layout)
    """
    w1t = jnp.asarray(w1).T                                      # [1536, 384]
    w1a = w1t[:D_EMB].astype(jnp.bfloat16)                       # [768, 384] (emb0 half)
    w1b = w1t[D_EMB:].astype(jnp.bfloat16)                       # [768, 384] (emb1 half)
    b1r = jnp.asarray(b1).reshape(1, D_HID).astype(jnp.float32)
    w2p = jnp.zeros((D_HID, D_OUT_PAD), jnp.bfloat16).at[:, :D_OUT].set(
        jnp.asarray(w2).T.astype(jnp.bfloat16))                  # [384, 128]
    b2p = jnp.zeros((1, D_OUT_PAD), jnp.float32).at[0, :D_OUT].set(
        jnp.asarray(b2).astype(jnp.float32))                     # [1, 128]
    return w1a, w1b, b1r, w2p, b2p


def _prefer_two_steps():
    # v7x has 2 TensorCores per chip; a single grid step runs on one TC only.
    # On v5e/v6e (1 TC) a single big tile is strictly better, so default False.
    try:
        return "7" in jax.devices()[0].device_kind
    except Exception:
        return False


def model_only_sim_head(emb0, emb1, params, tb=DEFAULT_TB):
    """emb0, emb1: [B, 768] pooled OAG-BERT embeddings (f32). params from prepare_params()."""
    w1a, w1b, b1r, w2p, b2p = params
    B = emb0.shape[0]

    # Balanced tiling: n_steps tiles of ~equal size, rows aligned to 8; last
    # (ragged) block is handled by Pallas masking -- no wrapper-side padding.
    n_steps = pl.cdiv(B, tb)
    if n_steps == 1 and B >= 2 * ROW_ALIGN and _prefer_two_steps():
        n_steps = 2                                   # feed both v7x TensorCores
    tb_eff = _round_up(pl.cdiv(B, n_steps), ROW_ALIGN)
    grid = (pl.cdiv(B, tb_eff),)

    out_padded = pl.pallas_call(
        _mlp_head_kernel,
        out_shape=jax.ShapeDtypeStruct((B, D_OUT_PAD), jnp.bfloat16),
        grid_spec=pltpu.PrefetchScalarGridSpec(
            num_scalar_prefetch=0,
            grid=grid,
            in_specs=[
                pl.BlockSpec((tb_eff, D_EMB), lambda i: (i, 0)),       # emb0 tile (f32)
                pl.BlockSpec((tb_eff, D_EMB), lambda i: (i, 0)),       # emb1 tile (f32)
                pl.BlockSpec((D_EMB, D_HID), lambda i: (0, 0)),        # W1a (resident)
                pl.BlockSpec((D_EMB, D_HID), lambda i: (0, 0)),        # W1b (resident)
                pl.BlockSpec((1, D_HID), lambda i: (0, 0)),            # b1
                pl.BlockSpec((D_HID, D_OUT_PAD), lambda i: (0, 0)),    # W2^T padded
                pl.BlockSpec((1, D_OUT_PAD), lambda i: (0, 0)),        # b2 padded
            ],
            out_specs=pl.BlockSpec((tb_eff, D_OUT_PAD), lambda i: (i, 0)),
        ),
        compiler_params=pltpu.CompilerParams(
            dimension_semantics=("parallel",),
            vmem_limit_bytes=40 << 20),   # f32 tiles @ TB=2048 overflow v5e's 16 MiB default
    )(emb0, emb1, w1a, w1b, b1r, w2p, b2p)

    # Slice off the padded lanes (sigmoid(0)=0.5 garbage) and return f32 probs.
    return out_padded[:, :D_OUT].astype(jnp.float32)


if __name__ == "__main__":
    key = jax.random.PRNGKey(0)
    k0, k1, kw1, kb1, kw2, kb2 = jax.random.split(key, 6)

    B = 8  # small demo batch
    # Pooled OAG-BERT embeddings for the two token dicts (stand-ins for the encoder).
    emb0 = jax.random.normal(k0, (B, D_EMB), dtype=jnp.float32)
    emb1 = jax.random.normal(k1, (B, D_EMB), dtype=jnp.float32)

    # Deterministic params matching nn.Linear(2*768, 384) / nn.Linear(384, 2).
    w1 = jax.random.normal(kw1, (D_HID, 2 * D_EMB), dtype=jnp.float32) / jnp.sqrt(2.0 * D_EMB)
    b1 = jax.random.normal(kb1, (D_HID,), dtype=jnp.float32) * 0.01
    w2 = jax.random.normal(kw2, (D_OUT, D_HID), dtype=jnp.float32) / jnp.sqrt(1.0 * D_HID)
    b2 = jax.random.normal(kb2, (D_OUT,), dtype=jnp.float32) * 0.01

    params = prepare_params(w1, b1, w2, b2)          # one-time prep, out of hot path
    out = model_only_sim_head(emb0, emb1, params)
    out = jax.block_until_ready(out)

    # Pure-JAX f32 reference (kernel uses bf16 matmuls with f32 accumulation).
    x = jnp.concatenate([emb0, emb1], axis=1)
    ref = jax.nn.sigmoid(jnp.maximum(x @ w1.T + b1, 0.0) @ w2.T + b2)
    assert out.shape == (B, D_OUT)
    assert jnp.allclose(out, ref, atol=3e-2), float(jnp.max(jnp.abs(out - ref)))

    print("KERNEL_OK")
</pallas_src>

<mosaic_0001>
module attributes {stable_mosaic.version = 11 : i64} {
  func.func @_mlp_head_kernel(%arg0: i32, %arg1: memref<8x768xf32, #tpu.memory_space<vmem>>, %arg2: memref<8x768xf32, #tpu.memory_space<vmem>>, %arg3: memref<768x384xbf16, #tpu.memory_space<vmem>>, %arg4: memref<768x384xbf16, #tpu.memory_space<vmem>>, %arg5: memref<1x384xf32, #tpu.memory_space<vmem>>, %arg6: memref<384x128xbf16, #tpu.memory_space<vmem>>, %arg7: memref<1x128xf32, #tpu.memory_space<vmem>>, %arg8: memref<8x128xbf16, #tpu.memory_space<vmem>>) attributes {dimension_semantics = [#tpu.dimension_semantics<parallel>], iteration_bounds = array<i64: 1>, scalar_prefetch = 0 : i64, scratch_operands = 0 : i64, tpu.core_type = #tpu.core_type<tc>, window_params = [{transform_indices = @transform_0, window_bounds = array<i64: 8, 768>}, {transform_indices = @transform_1, window_bounds = array<i64: 8, 768>}, {pipeline_mode = #tpu.pipeline_mode<synchronous>, transform_indices = @transform_2, window_bounds = array<i64: 768, 384>}, {pipeline_mode = #tpu.pipeline_mode<synchronous>, transform_indices = @transform_3, window_bounds = array<i64: 768, 384>}, {pipeline_mode = #tpu.pipeline_mode<synchronous>, transform_indices = @transform_4, window_bounds = array<i64: 1, 384>}, {pipeline_mode = #tpu.pipeline_mode<synchronous>, transform_indices = @transform_5, window_bounds = array<i64: 384, 128>}, {pipeline_mode = #tpu.pipeline_mode<synchronous>, transform_indices = @transform_6, window_bounds = array<i64: 1, 128>}, {transform_indices = @transform_7, window_bounds = array<i64: 8, 128>}]} {
    %c0 = arith.constant 0 : index
    %c0_0 = arith.constant 0 : index
    %0 = vector.load %arg1[%c0, %c0_0] : memref<8x768xf32, #tpu.memory_space<vmem>>, vector<8x768xf32>
    %1 = arith.truncf %0 : vector<8x768xf32> to vector<8x768xbf16>
    %c0_1 = arith.constant 0 : index
    %c0_2 = arith.constant 0 : index
    %2 = vector.load %arg2[%c0_1, %c0_2] : memref<8x768xf32, #tpu.memory_space<vmem>>, vector<8x768xf32>
    %3 = arith.truncf %2 : vector<8x768xf32> to vector<8x768xbf16>
    %c0_3 = arith.constant 0 : index
    %c0_4 = arith.constant 0 : index
    %4 = vector.load %arg3[%c0_3, %c0_4] : memref<768x384xbf16, #tpu.memory_space<vmem>>, vector<768x384xbf16>
    %cst = arith.constant dense<0.000000e+00> : vector<8x384xf32>
    %5 = tpu.matmul %1, %4, %cst {dimension_numbers = #tpu.dot_dimension_numbers<[1], [0], [0], [1], [0, 0, 1, 1], [], []>} : vector<8x768xbf16>, vector<768x384xbf16>, vector<8x384xf32> -> vector<8x384xf32>
    %c0_5 = arith.constant 0 : index
    %c0_6 = arith.constant 0 : index
    %6 = vector.load %arg4[%c0_5, %c0_6] : memref<768x384xbf16, #tpu.memory_space<vmem>>, vector<768x384xbf16>
    %cst_7 = arith.constant dense<0.000000e+00> : vector<8x384xf32>
    %7 = tpu.matmul %3, %6, %cst_7 {dimension_numbers = #tpu.dot_dimension_numbers<[1], [0], [0], [1], [0, 0, 1, 1], [], []>} : vector<8x768xbf16>, vector<768x384xbf16>, vector<8x384xf32> -> vector<8x384xf32>
    %8 = arith.addf %5, %7 : vector<8x384xf32>
    %c0_8 = arith.constant 0 : index
    %c0_9 = arith.constant 0 : index
    %9 = vector.load %arg5[%c0_8, %c0_9] : memref<1x384xf32, #tpu.memory_space<vmem>>, vector<1x384xf32>
    %10 = vector.broadcast %9 : vector<1x384xf32> to vector<8x384xf32>
    %11 = arith.addf %8, %10 : vector<8x384xf32>
    %cst_10 = arith.constant 0.000000e+00 : f32
    %12 = vector.broadcast %cst_10 : f32 to vector<8x384xf32>
    %13 = arith.maximumf %11, %12 : vector<8x384xf32>
    %14 = arith.truncf %13 : vector<8x384xf32> to vector<8x384xbf16>
    %c0_11 = arith.constant 0 : index
    %c0_12 = arith.constant 0 : index
    %15 = vector.load %arg6[%c0_11, %c0_12] : memref<384x128xbf16, #tpu.memory_space<vmem>>, vector<384x128xbf16>
    %cst_13 = arith.constant dense<0.000000e+00> : vector<8x128xf32>
    %16 = tpu.matmul %14, %15, %cst_13 {dimension_numbers = #tpu.dot_dimension_numbers<[1], [0], [0], [1], [0, 0, 1, 1], [], []>} : vector<8x384xbf16>, vector<384x128xbf16>, vector<8x128xf32> -> vector<8x128xf32>
    %c0_14 = arith.constant 0 : index
    %c0_15 = arith.constant 0 : index
    %17 = vector.load %arg7[%c0_14, %c0_15] : memref<1x128xf32, #tpu.memory_space<vmem>>, vector<1x128xf32>
    %18 = vector.broadcast %17 : vector<1x128xf32> to vector<8x128xf32>
    %19 = arith.addf %16, %18 : vector<8x128xf32>
    %20 = arith.negf %19 : vector<8x128xf32>
    %21 = math.exp %20 : vector<8x128xf32>
    %cst_16 = arith.constant 1.000000e+00 : f32
    %22 = vector.broadcast %cst_16 : f32 to vector<8x128xf32>
    %23 = arith.addf %22, %21 : vector<8x128xf32>
    %24 = arith.divf %22, %23 : vector<8x128xf32>
    %25 = arith.truncf %24 : vector<8x128xf32> to vector<8x128xbf16>
    %c0_17 = arith.constant 0 : index
    %c0_18 = arith.constant 0 : index
    %26 = vector.load %arg8[%c0_17, %c0_18] : memref<8x128xbf16, #tpu.memory_space<vmem>>, vector<8x128xbf16>
    tpu.vector_store %arg8[%c0_17, %c0_18], %25 {strides = array<i32>} : memref<8x128xbf16, #tpu.memory_space<vmem>>, vector<8x128xbf16>,
    return
  }
  func.func @transform_0(%arg0: i32) -> (i32, i32) {
    %c0_i32 = arith.constant 0 : i32
    %c0_i32_0 = arith.constant 0 : i32
    return %arg0, %c0_i32 : i32, i32
  }
  func.func @transform_1(%arg0: i32) -> (i32, i32) {
    %c0_i32 = arith.constant 0 : i32
    %c0_i32_0 = arith.constant 0 : i32
    return %arg0, %c0_i32 : i32, i32
  }
  func.func @transform_2(%arg0: i32) -> (i32, i32) {
    %c0_i32 = arith.constant 0 : i32
    %c0_i32_0 = arith.constant 0 : i32
    %c0_i32_1 = arith.constant 0 : i32
    return %c0_i32, %c0_i32_0 : i32, i32
  }
  func.func @transform_3(%arg0: i32) -> (i32, i32) {
    %c0_i32 = arith.constant 0 : i32
    %c0_i32_0 = arith.constant 0 : i32
    %c0_i32_1 = arith.constant 0 : i32
    return %c0_i32, %c0_i32_0 : i32, i32
  }
  func.func @transform_4(%arg0: i32) -> (i32, i32) {
    %c0_i32 = arith.constant 0 : i32
    %c0_i32_0 = arith.constant 0 : i32
    %c0_i32_1 = arith.constant 0 : i32
    return %c0_i32, %c0_i32_0 : i32, i32
  }
  func.func @transform_5(%arg0: i32) -> (i32, i32) {
    %c0_i32 = arith.constant 0 : i32
    %c0_i32_0 = arith.constant 0 : i32
    %c0_i32_1 = arith.constant 0 : i32
    return %c0_i32, %c0_i32_0 : i32, i32
  }
  func.func @transform_6(%arg0: i32) -> (i32, i32) {
    %c0_i32 = arith.constant 0 : i32
    %c0_i32_0 = arith.constant 0 : i32
    %c0_i32_1 = arith.constant 0 : i32
    return %c0_i32, %c0_i32_0 : i32, i32
  }
  func.func @transform_7(%arg0: i32) -> (i32, i32) {
    %c0_i32 = arith.constant 0 : i32
    %c0_i32_0 = arith.constant 0 : i32
    return %arg0, %c0_i32 : i32, i32
  }
}

</mosaic_0001>

<llo_original>
// kernel: tpu_custom_call.1
$region0: #{tpu_custom_call.1}
  #allocation0 [shape = 'u32[]', space=smem, size = 0x4, offset = 0x4, fixed_abs, tag = 'smem constant byte address 0x4 - core index']
  #allocation1 [shape = 'u32[144,128]{1,0:T(1,128)}', space=vmem, size = 0x12000, scoped, tag = 'internal scratch']
  %s0 = inlined_call_operand.hbm [shape: f32[8,768], index: 0, kind: input, shape index: {}]
  %s1 = inlined_call_operand.hbm [shape: f32[8,768], index: 1, kind: input, shape index: {}]
  %s2 = inlined_call_operand.hbm [shape: bf16[768,384], index: 2, kind: input, shape index: {}]
  %s3 = inlined_call_operand.hbm [shape: bf16[768,384], index: 3, kind: input, shape index: {}]
  %s4 = inlined_call_operand.vmem [shape: f32[1,384], index: 4, kind: input, shape index: {}]
  %s5 = inlined_call_operand.hbm [shape: bf16[384,128], index: 5, kind: input, shape index: {}]
  %s6 = inlined_call_operand.vmem [shape: f32[1,128], index: 6, kind: input, shape index: {}]
  %s7 = inlined_call_operand.hbm [shape: bf16[8,128], index: 7, kind: output, shape index: {}]
  %s8 = sld [smem:[#allocation0]]
  $region58: #{tpu_custom_call.1} parent=0
    _
  %s10 = ssub.s32 1, %s8
  %s11 = scalar_select 0, %s10, %s8
  $region1: #{tpu_custom_call.1} parent=0
    #allocation2 [shape = 'u8[24576]{0}', space=vmem, size = 0x6000, scoped, tag = 'input window, operand 0, single buffered']
    #allocation3 [shape = 's32[1]{0}', space=sflag, size = 0x4, scoped, tag = 'scoped memory for tpu_custom_call.1']
    #allocation4 [shape = 's32[1]{0}', space=sflag, size = 0x4, scoped, tag = 'scoped memory for tpu_custom_call.1']
    #allocation5 [shape = 'u8[24576]{0}', space=vmem, size = 0x6000, scoped, tag = 'input window, operand 1, single buffered']
    #allocation6 [shape = 's32[1]{0}', space=sflag, size = 0x4, scoped, tag = 'scoped memory for tpu_custom_call.1']
    #allocation7 [shape = 'u8[589824]{0}', space=vmem, size = 0x90000, scoped, tag = 'input window, operand 2, single buffered']
    #allocation8 [shape = 'u8[589824]{0}', space=vmem, size = 0x90000, scoped, tag = 'input window, operand 3, single buffered']
    #allocation9 [shape = 's32[1]{0}', space=sflag, size = 0x4, scoped, tag = 'scoped memory for tpu_custom_call.1']
    #allocation10 [shape = 'u8[98304]{0}', space=vmem, size = 0x18000, scoped, tag = 'input window, operand 5, single buffered']
    #allocation11 [shape = 'u8[2048]{0}', space=vmem, size = 0x800, scoped, tag = 'output window, operand 0, single buffered']
    %12 = vsyncpa [#allocation3], 0
    %13 = vsyncpa [#allocation6], 0
    %14 = vsyncpa [#allocation9], 0
    %15 = vsyncpa [#allocation4], 0
    // Predicated region
    $region2: #{tpu_custom_call.1} parent=1 // pred_check
      _
    $region3: #{tpu_custom_call.1} parent=1 // pred_check_branch
      %17 = sbr.rel (0) target = $region5
    $region4: #{tpu_custom_call.1} parent=1 // pred_region
      %s19 = ssub.s32 768, 768
      %20 = vsyncadd [#allocation3], %s19
      %s22 = sshll.u32 [#allocation2], 4
      %s23 = int_to_ptr.vmem [resolvable:$true] %s22
      %25 = dma.hbm_to_vmem [thread:$0]  %s0, 768, %s23, [#allocation3]
    $region5: #{tpu_custom_call.1} parent=1 // pred_fallthru
      _
    // Predicated region
    $region6: #{tpu_custom_call.1} parent=1 // pred_check
      _
    $region7: #{tpu_custom_call.1} parent=1 // pred_check_branch
      %27 = sbr.rel (0) target = $region9
    $region8: #{tpu_custom_call.1} parent=1 // pred_region
      %s29 = ssub.s32 768, 768
      %30 = vsyncadd [#allocation6], %s29
      %s32 = sshll.u32 [#allocation5], 4
      %s33 = int_to_ptr.vmem [resolvable:$true] %s32
      %35 = dma.hbm_to_vmem [thread:$0]  %s1, 768, %s33, [#allocation6]
    $region9: #{tpu_custom_call.1} parent=1 // pred_fallthru
      _
    // Predicated region
    $region10: #{tpu_custom_call.1} parent=1 // pred_check
      _
    $region11: #{tpu_custom_call.1} parent=1 // pred_check_branch
      %37 = sbr.rel (0) target = $region13
    $region12: #{tpu_custom_call.1} parent=1 // pred_region
      %s39 = ssub.s32 18432, 18432
      %40 = vsyncadd [#allocation6], %s39
      %s41 = sshll.u32 [#allocation7], 4
      %s42 = int_to_ptr.vmem [resolvable:$true] %s41
      %47 = dma.hbm_to_vmem [thread:$0]  %s2, 18432, %s42, [#allocation6], 192, 192, 12
    $region13: #{tpu_custom_call.1} parent=1 // pred_fallthru
      _
    // Predicated region
    $region14: #{tpu_custom_call.1} parent=1 // pred_check
      _
    $region15: #{tpu_custom_call.1} parent=1 // pred_check_branch
      %49 = sbr.rel (0) target = $region17
    $region16: #{tpu_custom_call.1} parent=1 // pred_region
      %s51 = ssub.s32 18432, 18432
      %52 = vsyncadd [#allocation9], %s51
      %s53 = sshll.u32 [#allocation8], 4
      %s54 = int_to_ptr.vmem [resolvable:$true] %s53
      %59 = dma.hbm_to_vmem [thread:$0]  %s3, 18432, %s54, [#allocation9], 192, 192, 12
    $region17: #{tpu_custom_call.1} parent=1 // pred_fallthru
      _
    // Predicated region
    $region18: #{tpu_custom_call.1} parent=1 // pred_check
      _
    $region19: #{tpu_custom_call.1} parent=1 // pred_check_branch
      %61 = sbr.rel (0) target = $region21
    $region20: #{tpu_custom_call.1} parent=1 // pred_region
      _
    $region21: #{tpu_custom_call.1} parent=1 // pred_fallthru
      _
    // Predicated region
    $region22: #{tpu_custom_call.1} parent=1 // pred_check
      _
    $region23: #{tpu_custom_call.1} parent=1 // pred_check_branch
      %63 = sbr.rel (0) target = $region25
    $region24: #{tpu_custom_call.1} parent=1 // pred_region
      %s65 = ssub.s32 3072, 3072
      %66 = vsyncadd [#allocation9], %s65
      %s67 = sshll.u32 [#allocation10], 4
      %s68 = int_to_ptr.vmem [resolvable:$true] %s67
      %73 = dma.hbm_to_vmem [thread:$0]  %s5, 3072, %s68, [#allocation9], 64, 64, 4
    $region25: #{tpu_custom_call.1} parent=1 // pred_fallthru
      _
    // Predicated region
    $region26: #{tpu_custom_call.1} parent=1 // pred_check
      _
    $region27: #{tpu_custom_call.1} parent=1 // pred_check_branch
      %75 = sbr.rel (0) target = $region29
    $region28: #{tpu_custom_call.1} parent=1 // pred_region
      _
    $region29: #{tpu_custom_call.1} parent=1 // pred_fallthru
      _
    // Predicated region
    $region30: #{tpu_custom_call.1} parent=1 // pred_check
      _
    $region31: #{tpu_custom_call.1} parent=1 // pred_check_branch
      %77 = sbr.rel (0) target = $region33
    $region32: #{tpu_custom_call.1} parent=1 // pred_region
      %78 = dma.done [#allocation3], 768
    $region33: #{tpu_custom_call.1} parent=1 // pred_fallthru
      _
    // Predicated region
    $region34: #{tpu_custom_call.1} parent=1 // pred_check
      _
    $region35: #{tpu_custom_call.1} parent=1 // pred_check_branch
      %80 = sbr.rel (0) target = $region37
    $region36: #{tpu_custom_call.1} parent=1 // pred_region
      %81 = dma.done [#allocation6], 768
    $region37: #{tpu_custom_call.1} parent=1 // pred_fallthru
      _
    // Predicated region
    $region38: #{tpu_custom_call.1} parent=1 // pred_check
      _
    $region39: #{tpu_custom_call.1} parent=1 // pred_check_branch
      %83 = sbr.rel (0) target = $region41
    $region40: #{tpu_custom_call.1} parent=1 // pred_region
      %84 = dma.done [#allocation6], 18432
    $region41: #{tpu_custom_call.1} parent=1 // pred_fallthru
      _
    // Predicated region
    $region42: #{tpu_custom_call.1} parent=1 // pred_check
      _
    $region43: #{tpu_custom_call.1} parent=1 // pred_check_branch
      %86 = sbr.rel (0) target = $region45
    $region44: #{tpu_custom_call.1} parent=1 // pred_region
      %87 = dma.done [#allocation9], 18432
    $region45: #{tpu_custom_call.1} parent=1 // pred_fallthru
      _
    // Predicated region
    $region46: #{tpu_custom_call.1} parent=1 // pred_check
      _
    $region47: #{tpu_custom_call.1} parent=1 // pred_check_branch
      %89 = sbr.rel (0) target = $region49
    $region48: #{tpu_custom_call.1} parent=1 // pred_region
      %90 = dma.done [#allocation9], 3072
    $region49: #{tpu_custom_call.1} parent=1 // pred_fallthru
      _
    %v92 = vld [vmem:[#allocation2] sm:$0xff]
    %v93 = vld [vmem:[#allocation2 + $0x8] sm:$0xff]
    %v94 = vld [vmem:[#allocation2 + $0x10] sm:$0xff]
    %v95 = vld [vmem:[#allocation2 + $0x18] sm:$0xff]
    %v96 = vld [vmem:[#allocation2 + $0x20] sm:$0xff]
    %v97 = vld [vmem:[#allocation2 + $0x28] sm:$0xff]
    %v98 = vpack.c.bf16 %v92, %v92
    %v99 = vpack.c.bf16 %v93, %v93
    %v100 = vpack.c.bf16 %v94, %v94
    %v101 = vpack.c.bf16 %v95, %v95
    %v102 = vpack.c.bf16 %v96, %v96
    %v103 = vpack.c.bf16 %v97, %v97
    %v104 = vld [vmem:[#allocation5] sm:$0xff]
    %v105 = vld [vmem:[#allocation5 + $0x8] sm:$0xff]
    %v106 = vld [vmem:[#allocation5 + $0x10] sm:$0xff]
    %v107 = vld [vmem:[#allocation5 + $0x18] sm:$0xff]
    %v108 = vld [vmem:[#allocation5 + $0x20] sm:$0xff]
    %v109 = vld [vmem:[#allocation5 + $0x28] sm:$0xff]
    %v110 = vpack.c.bf16 %v104, %v104
    %v111 = vpack.c.bf16 %v105, %v105
    %v112 = vpack.c.bf16 %v106, %v106
    %v113 = vpack.c.bf16 %v107, %v107
    %v114 = vpack.c.bf16 %v108, %v108
    %v115 = vpack.c.bf16 %v109, %v109
    %v116 = vld [vmem:[#allocation7] sm:$0xff]
    %v117 = vld [vmem:[#allocation7 + $0x8] sm:$0xf]
    %v118 = vld [vmem:[#allocation7 + $0xc] sm:$0xff]
    %v119 = vld [vmem:[#allocation7 + $0x14] sm:$0xf]
    %v120 = vld [vmem:[#allocation7 + $0x18] sm:$0xff]
    %v121 = vld [vmem:[#allocation7 + $0x20] sm:$0xf]
    %v122 = vld [vmem:[#allocation7 + $0x24] sm:$0xff]
    %v123 = vld [vmem:[#allocation7 + $0x2c] sm:$0xf]
    %v124 = vld [vmem:[#allocation7 + $0x30] sm:$0xff]
    %v125 = vld [vmem:[#allocation7 + $0x38] sm:$0xf]
    %v126 = vld [vmem:[#allocation7 + $0x3c] sm:$0xff]
    %v127 = vld [vmem:[#allocation7 + $0x44] sm:$0xf]
    %v128 = vld [vmem:[#allocation7 + $0x48] sm:$0xff]
    %v129 = vld [vmem:[#allocation7 + $0x50] sm:$0xf]
    %v130 = vld [vmem:[#allocation7 + $0x54] sm:$0xff]
    %v131 = vld [vmem:[#allocation7 + $0x5c] sm:$0xf]
    %v132 = vld [vmem:[#allocation7 + $0x60] sm:$0xff]
    %v133 = vld [vmem:[#allocation7 + $0x68] sm:$0xf]
    %v134 = vld [vmem:[#allocation7 + $0x6c] sm:$0xff]
    %v135 = vld [vmem:[#allocation7 + $0x74] sm:$0xf]
    %v136 = vld [vmem:[#allocation7 + $0x78] sm:$0xff]
    %v137 = vld [vmem:[#allocation7 + $0x80] sm:$0xf]
    %v138 = vld [vmem:[#allocation7 + $0x84] sm:$0xff]
    %v139 = vld [vmem:[#allocation7 + $0x8c] sm:$0xf]
    %v140 = vld [vmem:[#allocation7 + $0x90] sm:$0xff]
    %v141 = vld [vmem:[#allocation7 + $0x98] sm:$0xf]
    %v142 = vld [vmem:[#allocation7 + $0x9c] sm:$0xff]
    %v143 = vld [vmem:[#allocation7 + $0xa4] sm:$0xf]
    %v144 = vld [vmem:[#allocation7 + $0xa8] sm:$0xff]
    %v145 = vld [vmem:[#allocation7 + $0xb0] sm:$0xf]
    %v146 = vld [vmem:[#allocation7 + $0xb4] sm:$0xff]
    %v147 = vld [vmem:[#allocation7 + $0xbc] sm:$0xf]
    %v148 = vld [vmem:[#allocation7 + $0xc0] sm:$0xff]
    %v149 = vld [vmem:[#allocation7 + $0xc8] sm:$0xf]
    %v150 = vld [vmem:[#allocation7 + $0xcc] sm:$0xff]
    %v151 = vld [vmem:[#allocation7 + $0xd4] sm:$0xf]
    %v152 = vld [vmem:[#allocation7 + $0xd8] sm:$0xff]
    %v153 = vld [vmem:[#allocation7 + $0xe0] sm:$0xf]
    %v154 = vld [vmem:[#allocation7 + $0xe4] sm:$0xff]
    %v155 = vld [vmem:[#allocation7 + $0xec] sm:$0xf]
    %v156 = vld [vmem:[#allocation7 + $0xf0] sm:$0xff]
    %v157 = vld [vmem:[#allocation7 + $0xf8] sm:$0xf]
    %v158 = vld [vmem:[#allocation7 + $0xfc] sm:$0xff]
    %v159 = vld [vmem:[#allocation7 + $0x104] sm:$0xf]
    %v160 = vld [vmem:[#allocation7 + $0x108] sm:$0xff]
    %v161 = vld [vmem:[#allocation7 + $0x110] sm:$0xf]
    %v162 = vld [vmem:[#allocation7 + $0x114] sm:$0xff]
    %v163 = vld [vmem:[#allocation7 + $0x11c] sm:$0xf]
    %v164 = vld [vmem:[#allocation7 + $0x120] sm:$0xff]
    %v165 = vld [vmem:[#allocation7 + $0x128] sm:$0xf]
    %v166 = vld [vmem:[#allocation7 + $0x12c] sm:$0xff]
    %v167 = vld [vmem:[#allocation7 + $0x134] sm:$0xf]
    %v168 = vld [vmem:[#allocation7 + $0x138] sm:$0xff]
    %v169 = vld [vmem:[#allocation7 + $0x140] sm:$0xf]
    %v170 = vld [vmem:[#allocation7 + $0x144] sm:$0xff]
    %v171 = vld [vmem:[#allocation7 + $0x14c] sm:$0xf]
    %v172 = vld [vmem:[#allocation7 + $0x150] sm:$0xff]
    %v173 = vld [vmem:[#allocation7 + $0x158] sm:$0xf]
    %v174 = vld [vmem:[#allocation7 + $0x15c] sm:$0xff]
    %v175 = vld [vmem:[#allocation7 + $0x164] sm:$0xf]
    %v176 = vld [vmem:[#allocation7 + $0x168] sm:$0xff]
    %v177 = vld [vmem:[#allocation7 + $0x170] sm:$0xf]
    %v178 = vld [vmem:[#allocation7 + $0x174] sm:$0xff]
    %v179 = vld [vmem:[#allocation7 + $0x17c] sm:$0xf]
    %v180 = vld [vmem:[#allocation7 + $0x180] sm:$0xff]
    %v181 = vld [vmem:[#allocation7 + $0x188] sm:$0xf]
    %v182 = vld [vmem:[#allocation7 + $0x18c] sm:$0xff]
    %v183 = vld [vmem:[#allocation7 + $0x194] sm:$0xf]
    %v184 = vld [vmem:[#allocation7 + $0x198] sm:$0xff]
    %v185 = vld [vmem:[#allocation7 + $0x1a0] sm:$0xf]
    %v186 = vld [vmem:[#allocation7 + $0x1a4] sm:$0xff]
    %v187 = vld [vmem:[#allocation7 + $0x1ac] sm:$0xf]
    %v188 = vld [vmem:[#allocation7 + $0x1b0] sm:$0xff]
    %v189 = vld [vmem:[#allocation7 + $0x1b8] sm:$0xf]
    %v190 = vld [vmem:[#allocation7 + $0x1bc] sm:$0xff]
    %v191 = vld [vmem:[#allocation7 + $0x1c4] sm:$0xf]
    %v192 = vld [vmem:[#allocation7 + $0x1c8] sm:$0xff]
    %v193 = vld [vmem:[#allocation7 + $0x1d0] sm:$0xf]
    %v194 = vld [vmem:[#allocation7 + $0x1d4] sm:$0xff]
    %v195 = vld [vmem:[#allocation7 + $0x1dc] sm:$0xf]
    %v196 = vld [vmem:[#allocation7 + $0x1e0] sm:$0xff]
    %v197 = vld [vmem:[#allocation7 + $0x1e8] sm:$0xf]
    %v198 = vld [vmem:[#allocation7 + $0x1ec] sm:$0xff]
    %v199 = vld [vmem:[#allocation7 + $0x1f4] sm:$0xf]
    %v200 = vld [vmem:[#allocation7 + $0x1f8] sm:$0xff]
    %v201 = vld [vmem:[#allocation7 + $0x200] sm:$0xf]
    %v202 = vld [vmem:[#allocation7 + $0x204] sm:$0xff]
    %v203 = vld [vmem:[#allocation7 + $0x20c] sm:$0xf]
    %v204 = vld [vmem:[#allocation7 + $0x210] sm:$0xff]
    %v205 = vld [vmem:[#allocation7 + $0x218] sm:$0xf]
    %v206 = vld [vmem:[#allocation7 + $0x21c] sm:$0xff]
    %v207 = vld [vmem:[#allocation7 + $0x224] sm:$0xf]
    %v208 = vld [vmem:[#allocation7 + $0x228] sm:$0xff]
    %v209 = vld [vmem:[#allocation7 + $0x230] sm:$0xf]
    %v210 = vld [vmem:[#allocation7 + $0x234] sm:$0xff]
    %v211 = vld [vmem:[#allocation7 + $0x23c] sm:$0xf]
    %v212 = vld [vmem:[#allocation7 + $0x240] sm:$0xff]
    %v213 = vld [vmem:[#allocation7 + $0x248] sm:$0xf]
    %v214 = vld [vmem:[#allocation7 + $0x24c] sm:$0xff]
    %v215 = vld [vmem:[#allocation7 + $0x254] sm:$0xf]
    %v216 = vld [vmem:[#allocation7 + $0x258] sm:$0xff]
    %v217 = vld [vmem:[#allocation7 + $0x260] sm:$0xf]
    %v218 = vld [vmem:[#allocation7 + $0x264] sm:$0xff]
    %v219 = vld [vmem:[#allocation7 + $0x26c] sm:$0xf]
    %v220 = vld [vmem:[#allocation7 + $0x270] sm:$0xff]
    %v221 = vld [vmem:[#allocation7 + $0x278] sm:$0xf]
    %v222 = vld [vmem:[#allocation7 + $0x27c] sm:$0xff]
    %v223 = vld [vmem:[#allocation7 + $0x284] sm:$0xf]
    %v224 = vld [vmem:[#allocation7 + $0x288] sm:$0xff]
    %v225 = vld [vmem:[#allocation7 + $0x290] sm:$0xf]
    %v226 = vld [vmem:[#allocation7 + $0x294] sm:$0xff]
    %v227 = vld [vmem:[#allocation7 + $0x29c] sm:$0xf]
    %v228 = vld [vmem:[#allocation7 + $0x2a0] sm:$0xff]
    %v229 = vld [vmem:[#allocation7 + $0x2a8] sm:$0xf]
    %v230 = vld [vmem:[#allocation7 + $0x2ac] sm:$0xff]
    %v231 = vld [vmem:[#allocation7 + $0x2b4] sm:$0xf]
    %v232 = vld [vmem:[#allocation7 + $0x2b8] sm:$0xff]
    %v233 = vld [vmem:[#allocation7 + $0x2c0] sm:$0xf]
    %v234 = vld [vmem:[#allocation7 + $0x2c4] sm:$0xff]
    %v235 = vld [vmem:[#allocation7 + $0x2cc] sm:$0xf]
    %v236 = vld [vmem:[#allocation7 + $0x2d0] sm:$0xff]
    %v237 = vld [vmem:[#allocation7 + $0x2d8] sm:$0xf]
    %v238 = vld [vmem:[#allocation7 + $0x2dc] sm:$0xff]
    %v239 = vld [vmem:[#allocation7 + $0x2e4] sm:$0xf]
    %v240 = vld [vmem:[#allocation7 + $0x2e8] sm:$0xff]
    %v241 = vld [vmem:[#allocation7 + $0x2f0] sm:$0xf]
    %v242 = vld [vmem:[#allocation7 + $0x2f4] sm:$0xff]
    %v243 = vld [vmem:[#allocation7 + $0x2fc] sm:$0xf]
    %v244 = vld [vmem:[#allocation7 + $0x300] sm:$0xff]
    %v245 = vld [vmem:[#allocation7 + $0x308] sm:$0xf]
    %v246 = vld [vmem:[#allocation7 + $0x30c] sm:$0xff]
    %v247 = vld [vmem:[#allocation7 + $0x314] sm:$0xf]
    %v248 = vld [vmem:[#allocation7 + $0x318] sm:$0xff]
    %v249 = vld [vmem:[#allocation7 + $0x320] sm:$0xf]
    %v250 = vld [vmem:[#allocation7 + $0x324] sm:$0xff]
    %v251 = vld [vmem:[#allocation7 + $0x32c] sm:$0xf]
    %v252 = vld [vmem:[#allocation7 + $0x330] sm:$0xff]
    %v253 = vld [vmem:[#allocation7 + $0x338] sm:$0xf]
    %v254 = vld [vmem:[#allocation7 + $0x33c] sm:$0xff]
    %v255 = vld [vmem:[#allocation7 + $0x344] sm:$0xf]
    %v256 = vld [vmem:[#allocation7 + $0x348] sm:$0xff]
    %v257 = vld [vmem:[#allocation7 + $0x350] sm:$0xf]
    %v258 = vld [vmem:[#allocation7 + $0x354] sm:$0xff]
    %v259 = vld [vmem:[#allocation7 + $0x35c] sm:$0xf]
    %v260 = vld [vmem:[#allocation7 + $0x360] sm:$0xff]
    %v261 = vld [vmem:[#allocation7 + $0x368] sm:$0xf]
    %v262 = vld [vmem:[#allocation7 + $0x36c] sm:$0xff]
    %v263 = vld [vmem:[#allocation7 + $0x374] sm:$0xf]
    %v264 = vld [vmem:[#allocation7 + $0x378] sm:$0xff]
    %v265 = vld [vmem:[#allocation7 + $0x380] sm:$0xf]
    %v266 = vld [vmem:[#allocation7 + $0x384] sm:$0xff]
    %v267 = vld [vmem:[#allocation7 + $0x38c] sm:$0xf]
    %v268 = vld [vmem:[#allocation7 + $0x390] sm:$0xff]
    %v269 = vld [vmem:[#allocation7 + $0x398] sm:$0xf]
    %v270 = vld [vmem:[#allocation7 + $0x39c] sm:$0xff]
    %v271 = vld [vmem:[#allocation7 + $0x3a4] sm:$0xf]
    %v272 = vld [vmem:[#allocation7 + $0x3a8] sm:$0xff]
    %v273 = vld [vmem:[#allocation7 + $0x3b0] sm:$0xf]
    %v274 = vld [vmem:[#allocation7 + $0x3b4] sm:$0xff]
    %v275 = vld [vmem:[#allocation7 + $0x3bc] sm:$0xf]
    %v276 = vld [vmem:[#allocation7 + $0x3c0] sm:$0xff]
    %v277 = vld [vmem:[#allocation7 + $0x3c8] sm:$0xf]
    %v278 = vld [vmem:[#allocation7 + $0x3cc] sm:$0xff]
    %v279 = vld [vmem:[#allocation7 + $0x3d4] sm:$0xf]
    %v280 = vld [vmem:[#allocation7 + $0x3d8] sm:$0xff]
    %v281 = vld [vmem:[#allocation7 + $0x3e0] sm:$0xf]
    %v282 = vld [vmem:[#allocation7 + $0x3e4] sm:$0xff]
    %v283 = vld [vmem:[#allocation7 + $0x3ec] sm:$0xf]
    %v284 = vld [vmem:[#allocation7 + $0x3f0] sm:$0xff]
    %v285 = vld [vmem:[#allocation7 + $0x3f8] sm:$0xf]
    %v286 = vld [vmem:[#allocation7 + $0x3fc] sm:$0xff]
    %v287 = vld [vmem:[#allocation7 + $0x404] sm:$0xf]
    %v288 = vld [vmem:[#allocation7 + $0x408] sm:$0xff]
    %v289 = vld [vmem:[#allocation7 + $0x410] sm:$0xf]
    %v290 = vld [vmem:[#allocation7 + $0x414] sm:$0xff]
    %v291 = vld [vmem:[#allocation7 + $0x41c] sm:$0xf]
    %v292 = vld [vmem:[#allocation7 + $0x420] sm:$0xff]
    %v293 = vld [vmem:[#allocation7 + $0x428] sm:$0xf]
    %v294 = vld [vmem:[#allocation7 + $0x42c] sm:$0xff]
    %v295 = vld [vmem:[#allocation7 + $0x434] sm:$0xf]
    %v296 = vld [vmem:[#allocation7 + $0x438] sm:$0xff]
    %v297 = vld [vmem:[#allocation7 + $0x440] sm:$0xf]
    %v298 = vld [vmem:[#allocation7 + $0x444] sm:$0xff]
    %v299 = vld [vmem:[#allocation7 + $0x44c] sm:$0xf]
    %v300 = vld [vmem:[#allocation7 + $0x450] sm:$0xff]
    %v301 = vld [vmem:[#allocation7 + $0x458] sm:$0xf]
    %v302 = vld [vmem:[#allocation7 + $0x45c] sm:$0xff]
    %v303 = vld [vmem:[#allocation7 + $0x464] sm:$0xf]
    %v304 = vld [vmem:[#allocation7 + $0x468] sm:$0xff]
    %v305 = vld [vmem:[#allocation7 + $0x470] sm:$0xf]
    %v306 = vld [vmem:[#allocation7 + $0x474] sm:$0xff]
    %v307 = vld [vmem:[#allocation7 + $0x47c] sm:$0xf]
    %v308 = vld [vmem:[#allocation8] sm:$0xff]
    %v309 = vld [vmem:[#allocation8 + $0x8] sm:$0xf]
    %v310 = vld [vmem:[#allocation8 + $0xc] sm:$0xff]
    %v311 = vld [vmem:[#allocation8 + $0x14] sm:$0xf]
    %v312 = vld [vmem:[#allocation8 + $0x18] sm:$0xff]
    %v313 = vld [vmem:[#allocation8 + $0x20] sm:$0xf]
    %v314 = vld [vmem:[#allocation8 + $0x24] sm:$0xff]
    %v315 = vld [vmem:[#allocation8 + $0x2c] sm:$0xf]
    %v316 = vld [vmem:[#allocation8 + $0x30] sm:$0xff]
    %v317 = vld [vmem:[#allocation8 + $0x38] sm:$0xf]
    %v318 = vld [vmem:[#allocation8 + $0x3c] sm:$0xff]
    %v319 = vld [vmem:[#allocation8 + $0x44] sm:$0xf]
    %v320 = vld [vmem:[#allocation8 + $0x48] sm:$0xff]
    %v321 = vld [vmem:[#allocation8 + $0x50] sm:$0xf]
    %v322 = vld [vmem:[#allocation8 + $0x54] sm:$0xff]
    %v323 = vld [vmem:[#allocation8 + $0x5c] sm:$0xf]
    %v324 = vld [vmem:[#allocation8 + $0x60] sm:$0xff]
    %v325 = vld [vmem:[#allocation8 + $0x68] sm:$0xf]
    %v326 = vld [vmem:[#allocation8 + $0x6c] sm:$0xff]
    %v327 = vld [vmem:[#allocation8 + $0x74] sm:$0xf]
    %v328 = vld [vmem:[#allocation8 + $0x78] sm:$0xff]
    %v329 = vld [vmem:[#allocation8 + $0x80] sm:$0xf]
    %v330 = vld [vmem:[#allocation8 + $0x84] sm:$0xff]
    %v331 = vld [vmem:[#allocation8 + $0x8c] sm:$0xf]
    %v332 = vld [vmem:[#allocation8 + $0x90] sm:$0xff]
    %v333 = vld [vmem:[#allocation8 + $0x98] sm:$0xf]
    %v334 = vld [vmem:[#allocation8 + $0x9c] sm:$0xff]
    %v335 = vld [vmem:[#allocation8 + $0xa4] sm:$0xf]
    %v336 = vld [vmem:[#allocation8 + $0xa8] sm:$0xff]
    %v337 = vld [vmem:[#allocation8 + $0xb0] sm:$0xf]
    %v338 = vld [vmem:[#allocation8 + $0xb4] sm:$0xff]
    %v339 = vld [vmem:[#allocation8 + $0xbc] sm:$0xf]
    %v340 = vld [vmem:[#allocation8 + $0xc0] sm:$0xff]
    %v341 = vld [vmem:[#allocation8 + $0xc8] sm:$0xf]
    %v342 = vld [vmem:[#allocation8 + $0xcc] sm:$0xff]
    %v343 = vld [vmem:[#allocation8 + $0xd4] sm:$0xf]
    %v344 = vld [vmem:[#allocation8 + $0xd8] sm:$0xff]
    %v345 = vld [vmem:[#allocation8 + $0xe0] sm:$0xf]
    %v346 = vld [vmem:[#allocation8 + $0xe4] sm:$0xff]
    %v347 = vld [vmem:[#allocation8 + $0xec] sm:$0xf]
    %v348 = vld [vmem:[#allocation8 + $0xf0] sm:$0xff]
    %v349 = vld [vmem:[#allocation8 + $0xf8] sm:$0xf]
    %v350 = vld [vmem:[#allocation8 + $0xfc] sm:$0xff]
    %v351 = vld [vmem:[#allocation8 + $0x104] sm:$0xf]
    %v352 = vld [vmem:[#allocation8 + $0x108] sm:$0xff]
    %v353 = vld [vmem:[#allocation8 + $0x110] sm:$0xf]
    %v354 = vld [vmem:[#allocation8 + $0x114] sm:$0xff]
    %v355 = vld [vmem:[#allocation8 + $0x11c] sm:$0xf]
    %v356 = vld [vmem:[#allocation8 + $0x120] sm:$0xff]
    %v357 = vld [vmem:[#allocation8 + $0x128] sm:$0xf]
    %v358 = vld [vmem:[#allocation8 + $0x12c] sm:$0xff]
    %v359 = vld [vmem:[#allocation8 + $0x134] sm:$0xf]
    %v360 = vld [vmem:[#allocation8 + $0x138] sm:$0xff]
    %v361 = vld [vmem:[#allocation8 + $0x140] sm:$0xf]
    %v362 = vld [vmem:[#allocation8 + $0x144] sm:$0xff]
    %v363 = vld [vmem:[#allocation8 + $0x14c] sm:$0xf]
    %v364 = vld [vmem:[#allocation8 + $0x150] sm:$0xff]
    %v365 = vld [vmem:[#allocation8 + $0x158] sm:$0xf]
    %v366 = vld [vmem:[#allocation8 + $0x15c] sm:$0xff]
    %v367 = vld [vmem:[#allocation8 + $0x164] sm:$0xf]
    %v368 = vld [vmem:[#allocation8 + $0x168] sm:$0xff]
    %v369 = vld [vmem:[#allocation8 + $0x170] sm:$0xf]
    %v370 = vld [vmem:[#allocation8 + $0x174] sm:$0xff]
    %v371 = vld [vmem:[#allocation8 + $0x17c] sm:$0xf]
    %v372 = vld [vmem:[#allocation8 + $0x180] sm:$0xff]
    %v373 = vld [vmem:[#allocation8 + $0x188] sm:$0xf]
    %v374 = vld [vmem:[#allocation8 + $0x18c] sm:$0xff]
    %v375 = vld [vmem:[#allocation8 + $0x194] sm:$0xf]
    %v376 = vld [vmem:[#allocation8 + $0x198] sm:$0xff]
    %v377 = vld [vmem:[#allocation8 + $0x1a0] sm:$0xf]
    %v378 = vld [vmem:[#allocation8 + $0x1a4] sm:$0xff]
    %v379 = vld [vmem:[#allocation8 + $0x1ac] sm:$0xf]
    %v380 = vld [vmem:[#allocation8 + $0x1b0] sm:$0xff]
    %v381 = vld [vmem:[#allocation8 + $0x1b8] sm:$0xf]
    %v382 = vld [vmem:[#allocation8 + $0x1bc] sm:$0xff]
    %v383 = vld [vmem:[#allocation8 + $0x1c4] sm:$0xf]
    %v384 = vld [vmem:[#allocation8 + $0x1c8] sm:$0xff]
    %v385 = vld [vmem:[#allocation8 + $0x1d0] sm:$0xf]
    %v386 = vld [vmem:[#allocation8 + $0x1d4] sm:$0xff]
    %v387 = vld [vmem:[#allocation8 + $0x1dc] sm:$0xf]
    %v388 = vld [vmem:[#allocation8 + $0x1e0] sm:$0xff]
    %v389 = vld [vmem:[#allocation8 + $0x1e8] sm:$0xf]
    %v390 = vld [vmem:[#allocation8 + $0x1ec] sm:$0xff]
    %v391 = vld [vmem:[#allocation8 + $0x1f4] sm:$0xf]
    %v392 = vld [vmem:[#allocation8 + $0x1f8] sm:$0xff]
    %v393 = vld [vmem:[#allocation8 + $0x200] sm:$0xf]
    %v394 = vld [vmem:[#allocation8 + $0x204] sm:$0xff]
    %v395 = vld [vmem:[#allocation8 + $0x20c] sm:$0xf]
    %v396 = vld [vmem:[#allocation8 + $0x210] sm:$0xff]
    %v397 = vld [vmem:[#allocation8 + $0x218] sm:$0xf]
    %v398 = vld [vmem:[#allocation8 + $0x21c] sm:$0xff]
    %v399 = vld [vmem:[#allocation8 + $0x224] sm:$0xf]
    %v400 = vld [vmem:[#allocation8 + $0x228] sm:$0xff]
    %v401 = vld [vmem:[#allocation8 + $0x230] sm:$0xf]
    %v402 = vld [vmem:[#allocation8 + $0x234] sm:$0xff]
    %v403 = vld [vmem:[#allocation8 + $0x23c] sm:$0xf]
    %v404 = vld [vmem:[#allocation8 + $0x240] sm:$0xff]
    %v405 = vld [vmem:[#allocation8 + $0x248] sm:$0xf]
    %v406 = vld [vmem:[#allocation8 + $0x24c] sm:$0xff]
    %v407 = vld [vmem:[#allocation8 + $0x254] sm:$0xf]
    %v408 = vld [vmem:[#allocation8 + $0x258] sm:$0xff]
    %v409 = vld [vmem:[#allocation8 + $0x260] sm:$0xf]
    %v410 = vld [vmem:[#allocation8 + $0x264] sm:$0xff]
    %v411 = vld [vmem:[#allocation8 + $0x26c] sm:$0xf]
    %v412 = vld [vmem:[#allocation8 + $0x270] sm:$0xff]
    %v413 = vld [vmem:[#allocation8 + $0x278] sm:$0xf]
    %v414 = vld [vmem:[#allocation8 + $0x27c] sm:$0xff]
    %v415 = vld [vmem:[#allocation8 + $0x284] sm:$0xf]
    %v416 = vld [vmem:[#allocation8 + $0x288] sm:$0xff]
    %v417 = vld [vmem:[#allocation8 + $0x290] sm:$0xf]
    %v418 = vld [vmem:[#allocation8 + $0x294] sm:$0xff]
    %v419 = vld [vmem:[#allocation8 + $0x29c] sm:$0xf]
    %v420 = vld [vmem:[#allocation8 + $0x2a0] sm:$0xff]
    %v421 = vld [vmem:[#allocation8 + $0x2a8] sm:$0xf]
    %v422 = vld [vmem:[#allocation8 + $0x2ac] sm:$0xff]
    %v423 = vld [vmem:[#allocation8 + $0x2b4] sm:$0xf]
    %v424 = vld [vmem:[#allocation8 + $0x2b8] sm:$0xff]
    %v425 = vld [vmem:[#allocation8 + $0x2c0] sm:$0xf]
    %v426 = vld [vmem:[#allocation8 + $0x2c4] sm:$0xff]
    %v427 = vld [vmem:[#allocation8 + $0x2cc] sm:$0xf]
    %v428 = vld [vmem:[#allocation8 + $0x2d0] sm:$0xff]
    %v429 = vld [vmem:[#allocation8 + $0x2d8] sm:$0xf]
    %v430 = vld [vmem:[#allocation8 + $0x2dc] sm:$0xff]
    %v431 = vld [vmem:[#allocation8 + $0x2e4] sm:$0xf]
    %v432 = vld [vmem:[#allocation8 + $0x2e8] sm:$0xff]
    %v433 = vld [vmem:[#allocation8 + $0x2f0] sm:$0xf]
    %v434 = vld [vmem:[#allocation8 + $0x2f4] sm:$0xff]
    %v435 = vld [vmem:[#allocation8 + $0x2fc] sm:$0xf]
    %v436 = vld [vmem:[#allocation8 + $0x300] sm:$0xff]
    %v437 = vld [vmem:[#allocation8 + $0x308] sm:$0xf]
    %v438 = vld [vmem:[#allocation8 + $0x30c] sm:$0xff]
    %v439 = vld [vmem:[#allocation8 + $0x314] sm:$0xf]
    %v440 = vld [vmem:[#allocation8 + $0x318] sm:$0xff]
    %v441 = vld [vmem:[#allocation8 + $0x320] sm:$0xf]
    %v442 = vld [vmem:[#allocation8 + $0x324] sm:$0xff]
    %v443 = vld [vmem:[#allocation8 + $0x32c] sm:$0xf]
    %v444 = vld [vmem:[#allocation8 + $0x330] sm:$0xff]
    %v445 = vld [vmem:[#allocation8 + $0x338] sm:$0xf]
    %v446 = vld [vmem:[#allocation8 + $0x33c] sm:$0xff]
    %v447 = vld [vmem:[#allocation8 + $0x344] sm:$0xf]
    %v448 = vld [vmem:[#allocation8 + $0x348] sm:$0xff]
    %v449 = vld [vmem:[#allocation8 + $0x350] sm:$0xf]
    %v450 = vld [vmem:[#allocation8 + $0x354] sm:$0xff]
    %v451 = vld [vmem:[#allocation8 + $0x35c] sm:$0xf]
    %v452 = vld [vmem:[#allocation8 + $0x360] sm:$0xff]
    %v453 = vld [vmem:[#allocation8 + $0x368] sm:$0xf]
    %v454 = vld [vmem:[#allocation8 + $0x36c] sm:$0xff]
    %v455 = vld [vmem:[#allocation8 + $0x374] sm:$0xf]
    %v456 = vld [vmem:[#allocation8 + $0x378] sm:$0xff]
    %v457 = vld [vmem:[#allocation8 + $0x380] sm:$0xf]
    %v458 = vld [vmem:[#allocation8 + $0x384] sm:$0xff]
    %v459 = vld [vmem:[#allocation8 + $0x38c] sm:$0xf]
    %v460 = vld [vmem:[#allocation8 + $0x390] sm:$0xff]
    %v461 = vld [vmem:[#allocation8 + $0x398] sm:$0xf]
    %v462 = vld [vmem:[#allocation8 + $0x39c] sm:$0xff]
    %v463 = vld [vmem:[#allocation8 + $0x3a4] sm:$0xf]
    %v464 = vld [vmem:[#allocation8 + $0x3a8] sm:$0xff]
    %v465 = vld [vmem:[#allocation8 + $0x3b0] sm:$0xf]
    %v466 = vld [vmem:[#allocation8 + $0x3b4] sm:$0xff]
    %v467 = vld [vmem:[#allocation8 + $0x3bc] sm:$0xf]
    %v468 = vld [vmem:[#allocation8 + $0x3c0] sm:$0xff]
    %v469 = vld [vmem:[#allocation8 + $0x3c8] sm:$0xf]
    %v470 = vld [vmem:[#allocation8 + $0x3cc] sm:$0xff]
    %v471 = vld [vmem:[#allocation8 + $0x3d4] sm:$0xf]
    %v472 = vld [vmem:[#allocation8 + $0x3d8] sm:$0xff]
    %v473 = vld [vmem:[#allocation8 + $0x3e0] sm:$0xf]
    %v474 = vld [vmem:[#allocation8 + $0x3e4] sm:$0xff]
    %v475 = vld [vmem:[#allocation8 + $0x3ec] sm:$0xf]
    %v476 = vld [vmem:[#allocation8 + $0x3f0] sm:$0xff]
    %v477 = vld [vmem:[#allocation8 + $0x3f8] sm:$0xf]
    %v478 = vld [vmem:[#allocation8 + $0x3fc] sm:$0xff]
    %v479 = vld [vmem:[#allocation8 + $0x404] sm:$0xf]
    %v480 = vld [vmem:[#allocation8 + $0x408] sm:$0xff]
    %v481 = vld [vmem:[#allocation8 + $0x410] sm:$0xf]
    %v482 = vld [vmem:[#allocation8 + $0x414] sm:$0xff]
    %v483 = vld [vmem:[#allocation8 + $0x41c] sm:$0xf]
    %v484 = vld [vmem:[#allocation8 + $0x420] sm:$0xff]
    %v485 = vld [vmem:[#allocation8 + $0x428] sm:$0xf]
    %v486 = vld [vmem:[#allocation8 + $0x42c] sm:$0xff]
    %v487 = vld [vmem:[#allocation8 + $0x434] sm:$0xf]
    %v488 = vld [vmem:[#allocation8 + $0x438] sm:$0xff]
    %v489 = vld [vmem:[#allocation8 + $0x440] sm:$0xf]
    %v490 = vld [vmem:[#allocation8 + $0x444] sm:$0xff]
    %v491 = vld [vmem:[#allocation8 + $0x44c] sm:$0xf]
    %v492 = vld [vmem:[#allocation8 + $0x450] sm:$0xff]
    %v493 = vld [vmem:[#allocation8 + $0x458] sm:$0xf]
    %v494 = vld [vmem:[#allocation8 + $0x45c] sm:$0xff]
    %v495 = vld [vmem:[#allocation8 + $0x464] sm:$0xf]
    %v496 = vld [vmem:[#allocation8 + $0x468] sm:$0xff]
    %v497 = vld [vmem:[#allocation8 + $0x470] sm:$0xf]
    %v498 = vld [vmem:[#allocation8 + $0x474] sm:$0xff]
    %v499 = vld [vmem:[#allocation8 + $0x47c] sm:$0xf]
    %v692 = vunpack.c.l.b16 %v308
    %v693 = vunpack.c.h.b16 %v308
    %v694 = vunpack.c.l.b16 %v309
    %v695 = vunpack.c.l.b16 %v310
    %v696 = vunpack.c.h.b16 %v310
    %v697 = vunpack.c.l.b16 %v311
    %v698 = vunpack.c.l.b16 %v312
    %v699 = vunpack.c.h.b16 %v312
    %v700 = vunpack.c.l.b16 %v313
    %v701 = vunpack.c.l.b16 %v314
    %v702 = vunpack.c.h.b16 %v314
    %v703 = vunpack.c.l.b16 %v315
    %v704 = vunpack.c.l.b16 %v316
    %v705 = vunpack.c.h.b16 %v316
    %v706 = vunpack.c.l.b16 %v317
    %v707 = vunpack.c.l.b16 %v318
    %v708 = vunpack.c.h.b16 %v318
    %v709 = vunpack.c.l.b16 %v319
    %v710 = vunpack.c.l.b16 %v320
    %v711 = vunpack.c.h.b16 %v320
    %v712 = vunpack.c.l.b16 %v321
    %v713 = vunpack.c.l.b16 %v322
    %v714 = vunpack.c.h.b16 %v322
    %v715 = vunpack.c.l.b16 %v323
    %v716 = vunpack.c.l.b16 %v324
    %v717 = vunpack.c.h.b16 %v324
    %v718 = vunpack.c.l.b16 %v325
    %v719 = vunpack.c.l.b16 %v326
    %v720 = vunpack.c.h.b16 %v326
    %v721 = vunpack.c.l.b16 %v327
    %v722 = vunpack.c.l.b16 %v328
    %v723 = vunpack.c.h.b16 %v328
    %v724 = vunpack.c.l.b16 %v329
    %v725 = vunpack.c.l.b16 %v330
    %v726 = vunpack.c.h.b16 %v330
    %v727 = vunpack.c.l.b16 %v331
    %v728 = vunpack.c.l.b16 %v332
    %v729 = vunpack.c.h.b16 %v332
    %v730 = vunpack.c.l.b16 %v333
    %v731 = vunpack.c.l.b16 %v334
    %v732 = vunpack.c.h.b16 %v334
    %v733 = vunpack.c.l.b16 %v335
    %v734 = vunpack.c.l.b16 %v336
    %v735 = vunpack.c.h.b16 %v336
    %v736 = vunpack.c.l.b16 %v337
    %v737 = vunpack.c.l.b16 %v338
    %v738 = vunpack.c.h.b16 %v338
    %v739 = vunpack.c.l.b16 %v339
    %v740 = vunpack.c.l.b16 %v340
    %v741 = vunpack.c.h.b16 %v340
    %v742 = vunpack.c.l.b16 %v341
    %v743 = vunpack.c.l.b16 %v342
    %v744 = vunpack.c.h.b16 %v342
    %v745 = vunpack.c.l.b16 %v343
    %v746 = vunpack.c.l.b16 %v344
    %v747 = vunpack.c.h.b16 %v344
    %v748 = vunpack.c.l.b16 %v345
    %v749 = vunpack.c.l.b16 %v346
    %v750 = vunpack.c.h.b16 %v346
    %v751 = vunpack.c.l.b16 %v347
    %v752 = vunpack.c.l.b16 %v348
    %v753 = vunpack.c.h.b16 %v348
    %v754 = vunpack.c.l.b16 %v349
    %v755 = vunpack.c.l.b16 %v350
    %v756 = vunpack.c.h.b16 %v350
    %v757 = vunpack.c.l.b16 %v351
    %v758 = vunpack.c.l.b16 %v352
    %v759 = vunpack.c.h.b16 %v352
    %v760 = vunpack.c.l.b16 %v353
    %v761 = vunpack.c.l.b16 %v354
    %v762 = vunpack.c.h.b16 %v354
    %v763 = vunpack.c.l.b16 %v355
    %v764 = vunpack.c.l.b16 %v356
    %v765 = vunpack.c.h.b16 %v356
    %v766 = vunpack.c.l.b16 %v357
    %v767 = vunpack.c.l.b16 %v358
    %v768 = vunpack.c.h.b16 %v358
    %v769 = vunpack.c.l.b16 %v359
    %v770 = vunpack.c.l.b16 %v360
    %v771 = vunpack.c.h.b16 %v360
    %v772 = vunpack.c.l.b16 %v361
    %v773 = vunpack.c.l.b16 %v362
    %v774 = vunpack.c.h.b16 %v362
    %v775 = vunpack.c.l.b16 %v363
    %v776 = vunpack.c.l.b16 %v364
    %v777 = vunpack.c.h.b16 %v364
    %v778 = vunpack.c.l.b16 %v365
    %v779 = vunpack.c.l.b16 %v366
    %v780 = vunpack.c.h.b16 %v366
    %v781 = vunpack.c.l.b16 %v367
    %v782 = vunpack.c.l.b16 %v368
    %v783 = vunpack.c.h.b16 %v368
    %v784 = vunpack.c.l.b16 %v369
    %v785 = vunpack.c.l.b16 %v370
    %v786 = vunpack.c.h.b16 %v370
    %v787 = vunpack.c.l.b16 %v371
    %v788 = vunpack.c.l.b16 %v372
    %v789 = vunpack.c.h.b16 %v372
    %v790 = vunpack.c.l.b16 %v373
    %v791 = vunpack.c.l.b16 %v374
    %v792 = vunpack.c.h.b16 %v374
    %v793 = vunpack.c.l.b16 %v375
    %v794 = vunpack.c.l.b16 %v376
    %v795 = vunpack.c.h.b16 %v376
    %v796 = vunpack.c.l.b16 %v377
    %v797 = vunpack.c.l.b16 %v378
    %v798 = vunpack.c.h.b16 %v378
    %v799 = vunpack.c.l.b16 %v379
    %v800 = vunpack.c.l.b16 %v380
    %v801 = vunpack.c.h.b16 %v380
    %v802 = vunpack.c.l.b16 %v381
    %v803 = vunpack.c.l.b16 %v382
    %v804 = vunpack.c.h.b16 %v382
    %v805 = vunpack.c.l.b16 %v383
    %v806 = vunpack.c.l.b16 %v384
    %v807 = vunpack.c.h.b16 %v384
    %v808 = vunpack.c.l.b16 %v385
    %v809 = vunpack.c.l.b16 %v386
    %v810 = vunpack.c.h.b16 %v386
    %v811 = vunpack.c.l.b16 %v387
    %v812 = vunpack.c.l.b16 %v388
    %v813 = vunpack.c.h.b16 %v388
    %v814 = vunpack.c.l.b16 %v389
    %v815 = vunpack.c.l.b16 %v390
    %v816 = vunpack.c.h.b16 %v390
    %v817 = vunpack.c.l.b16 %v391
    %v818 = vunpack.c.l.b16 %v392
    %v819 = vunpack.c.h.b16 %v392
    %v820 = vunpack.c.l.b16 %v393
    %v821 = vunpack.c.l.b16 %v394
    %v822 = vunpack.c.h.b16 %v394
    %v823 = vunpack.c.l.b16 %v395
    %v824 = vunpack.c.l.b16 %v396
    %v825 = vunpack.c.h.b16 %v396
    %v826 = vunpack.c.l.b16 %v397
    %v827 = vunpack.c.l.b16 %v398
    %v828 = vunpack.c.h.b16 %v398
    %v829 = vunpack.c.l.b16 %v399
    %v830 = vunpack.c.l.b16 %v400
    %v831 = vunpack.c.h.b16 %v400
    %v832 = vunpack.c.l.b16 %v401
    %v833 = vunpack.c.l.b16 %v402
    %v834 = vunpack.c.h.b16 %v402
    %v835 = vunpack.c.l.b16 %v403
    %v836 = vunpack.c.l.b16 %v404
    %v837 = vunpack.c.h.b16 %v404
    %v838 = vunpack.c.l.b16 %v405
    %v839 = vunpack.c.l.b16 %v406
    %v840 = vunpack.c.h.b16 %v406
    %v841 = vunpack.c.l.b16 %v407
    %v842 = vunpack.c.l.b16 %v408
    %v843 = vunpack.c.h.b16 %v408
    %v844 = vunpack.c.l.b16 %v409
    %v845 = vunpack.c.l.b16 %v410
    %v846 = vunpack.c.h.b16 %v410
    %v847 = vunpack.c.l.b16 %v411
    %v848 = vunpack.c.l.b16 %v412
    %v849 = vunpack.c.h.b16 %v412
    %v850 = vunpack.c.l.b16 %v413
    %v851 = vunpack.c.l.b16 %v414
    %v852 = vunpack.c.h.b16 %v414
    %v853 = vunpack.c.l.b16 %v415
    %v854 = vunpack.c.l.b16 %v416
    %v855 = vunpack.c.h.b16 %v416
    %v856 = vunpack.c.l.b16 %v417
    %v857 = vunpack.c.l.b16 %v418
    %v858 = vunpack.c.h.b16 %v418
    %v859 = vunpack.c.l.b16 %v419
    %v860 = vunpack.c.l.b16 %v420
    %v861 = vunpack.c.h.b16 %v420
    %v862 = vunpack.c.l.b16 %v421
    %v863 = vunpack.c.l.b16 %v422
    %v864 = vunpack.c.h.b16 %v422
    %v865 = vunpack.c.l.b16 %v423
    %v866 = vunpack.c.l.b16 %v424
    %v867 = vunpack.c.h.b16 %v424
    %v868 = vunpack.c.l.b16 %v425
    %v869 = vunpack.c.l.b16 %v426
    %v870 = vunpack.c.h.b16 %v426
    %v871 = vunpack.c.l.b16 %v427
    %v872 = vunpack.c.l.b16 %v428
    %v873 = vunpack.c.h.b16 %v428
    %v874 = vunpack.c.l.b16 %v429
    %v875 = vunpack.c.l.b16 %v430
    %v876 = vunpack.c.h.b16 %v430
    %v877 = vunpack.c.l.b16 %v431
    %v878 = vunpack.c.l.b16 %v432
    %v879 = vunpack.c.h.b16 %v432
    %v880 = vunpack.c.l.b16 %v433
    %v881 = vunpack.c.l.b16 %v434
    %v882 = vunpack.c.h.b16 %v434
    %v883 = vunpack.c.l.b16 %v435
    %v884 = vunpack.c.l.b16 %v436
    %v885 = vunpack.c.h.b16 %v436
    %v886 = vunpack.c.l.b16 %v437
    %v887 = vunpack.c.l.b16 %v438
    %v888 = vunpack.c.h.b16 %v438
    %v889 = vunpack.c.l.b16 %v439
    %v890 = vunpack.c.l.b16 %v440
    %v891 = vunpack.c.h.b16 %v440
    %v892 = vunpack.c.l.b16 %v441
    %v893 = vunpack.c.l.b16 %v442
    %v894 = vunpack.c.h.b16 %v442
    %v895 = vunpack.c.l.b16 %v443
    %v896 = vunpack.c.l.b16 %v444
    %v897 = vunpack.c.h.b16 %v444
    %v898 = vunpack.c.l.b16 %v445
    %v899 = vunpack.c.l.b16 %v446
    %v900 = vunpack.c.h.b16 %v446
    %v901 = vunpack.c.l.b16 %v447
    %v902 = vunpack.c.l.b16 %v448
    %v903 = vunpack.c.h.b16 %v448
    %v904 = vunpack.c.l.b16 %v449
    %v905 = vunpack.c.l.b16 %v450
    %v906 = vunpack.c.h.b16 %v450
    %v907 = vunpack.c.l.b16 %v451
    %v908 = vunpack.c.l.b16 %v452
    %v909 = vunpack.c.h.b16 %v452
    %v910 = vunpack.c.l.b16 %v453
    %v911 = vunpack.c.l.b16 %v454
    %v912 = vunpack.c.h.b16 %v454
    %v913 = vunpack.c.l.b16 %v455
    %v914 = vunpack.c.l.b16 %v456
    %v915 = vunpack.c.h.b16 %v456
    %v916 = vunpack.c.l.b16 %v457
    %v917 = vunpack.c.l.b16 %v458
    %v918 = vunpack.c.h.b16 %v458
    %v919 = vunpack.c.l.b16 %v459
    %v920 = vunpack.c.l.b16 %v460
    %v921 = vunpack.c.h.b16 %v460
    %v922 = vunpack.c.l.b16 %v461
    %v923 = vunpack.c.l.b16 %v462
    %v924 = vunpack.c.h.b16 %v462
    %v925 = vunpack.c.l.b16 %v463
    %v926 = vunpack.c.l.b16 %v464
    %v927 = vunpack.c.h.b16 %v464
    %v928 = vunpack.c.l.b16 %v465
    %v929 = vunpack.c.l.b16 %v466
    %v930 = vunpack.c.h.b16 %v466
    %v931 = vunpack.c.l.b16 %v467
    %v932 = vunpack.c.l.b16 %v468
    %v933 = vunpack.c.h.b16 %v468
    %v934 = vunpack.c.l.b16 %v469
    %v935 = vunpack.c.l.b16 %v470
    %v936 = vunpack.c.h.b16 %v470
    %v937 = vunpack.c.l.b16 %v471
    %v938 = vunpack.c.l.b16 %v472
    %v939 = vunpack.c.h.b16 %v472
    %v940 = vunpack.c.l.b16 %v473
    %v941 = vunpack.c.l.b16 %v474
    %v942 = vunpack.c.h.b16 %v474
    %v943 = vunpack.c.l.b16 %v475
    %v944 = vunpack.c.l.b16 %v476
    %v945 = vunpack.c.h.b16 %v476
    %v946 = vunpack.c.l.b16 %v477
    %v947 = vunpack.c.l.b16 %v478
    %v948 = vunpack.c.h.b16 %v478
    %v949 = vunpack.c.l.b16 %v479
    %v950 = vunpack.c.l.b16 %v480
    %v951 = vunpack.c.h.b16 %v480
    %v952 = vunpack.c.l.b16 %v481
    %v953 = vunpack.c.l.b16 %v482
    %v954 = vunpack.c.h.b16 %v482
    %v955 = vunpack.c.l.b16 %v483
    %v956 = vunpack.c.l.b16 %v484
    %v957 = vunpack.c.h.b16 %v484
    %v958 = vunpack.c.l.b16 %v485
    %v959 = vunpack.c.l.b16 %v486
    %v960 = vunpack.c.h.b16 %v486
    %v961 = vunpack.c.l.b16 %v487
    %v962 = vunpack.c.l.b16 %v488
    %v963 = vunpack.c.h.b16 %v488
    %v964 = vunpack.c.l.b16 %v489
    %v965 = vunpack.c.l.b16 %v490
    %v966 = vunpack.c.h.b16 %v490
    %v967 = vunpack.c.l.b16 %v491
    %v968 = vunpack.c.l.b16 %v492
    %v969 = vunpack.c.h.b16 %v492
    %v970 = vunpack.c.l.b16 %v493
    %v971 = vunpack.c.l.b16 %v494
    %v972 = vunpack.c.h.b16 %v494
    %v973 = vunpack.c.l.b16 %v495
    %v974 = vunpack.c.l.b16 %v496
    %v975 = vunpack.c.h.b16 %v496
    %v976 = vunpack.c.l.b16 %v497
    %v977 = vunpack.c.l.b16 %v498
    %v978 = vunpack.c.h.b16 %v498
    %v979 = vunpack.c.l.b16 %v499
    %v980 = vpack.c.b16 %v695, %v692
    %v981 = vpack.c.b16 %v696, %v693
    %v982 = vpack.c.b16 %v697, %v694
    %v983 = vpack.c.b16 %v701, %v698
    %v984 = vpack.c.b16 %v702, %v699
    %v985 = vpack.c.b16 %v703, %v700
    %v986 = vpack.c.b16 %v707, %v704
    %v987 = vpack.c.b16 %v708, %v705
    %v988 = vpack.c.b16 %v709, %v706
    %v989 = vpack.c.b16 %v713, %v710
    %v990 = vpack.c.b16 %v714, %v711
    %v991 = vpack.c.b16 %v715, %v712
    %v992 = vpack.c.b16 %v719, %v716
    %v993 = vpack.c.b16 %v720, %v717
    %v994 = vpack.c.b16 %v721, %v718
    %v995 = vpack.c.b16 %v725, %v722
    %v996 = vpack.c.b16 %v726, %v723
    %v997 = vpack.c.b16 %v727, %v724
    %v998 = vpack.c.b16 %v731, %v728
    %v999 = vpack.c.b16 %v732, %v729
    %v1000 = vpack.c.b16 %v733, %v730
    %v1001 = vpack.c.b16 %v737, %v734
    %v1002 = vpack.c.b16 %v738, %v735
    %v1003 = vpack.c.b16 %v739, %v736
    %v1004 = vpack.c.b16 %v743, %v740
    %v1005 = vpack.c.b16 %v744, %v741
    %v1006 = vpack.c.b16 %v745, %v742
    %v1007 = vpack.c.b16 %v749, %v746
    %v1008 = vpack.c.b16 %v750, %v747
    %v1009 = vpack.c.b16 %v751, %v748
    %v1010 = vpack.c.b16 %v755, %v752
    %v1011 = vpack.c.b16 %v756, %v753
    %v1012 = vpack.c.b16 %v757, %v754
    %v1013 = vpack.c.b16 %v761, %v758
    %v1014 = vpack.c.b16 %v762, %v759
    %v1015 = vpack.c.b16 %v763, %v760
    %v1016 = vpack.c.b16 %v767, %v764
    %v1017 = vpack.c.b16 %v768, %v765
    %v1018 = vpack.c.b16 %v769, %v766
    %v1019 = vpack.c.b16 %v773, %v770
    %v1020 = vpack.c.b16 %v774, %v771
    %v1021 = vpack.c.b16 %v775, %v772
    %v1022 = vpack.c.b16 %v779, %v776
    %v1023 = vpack.c.b16 %v780, %v777
    %v1024 = vpack.c.b16 %v781, %v778
    %v1025 = vpack.c.b16 %v785, %v782
    %v1026 = vpack.c.b16 %v786, %v783
    %v1027 = vpack.c.b16 %v787, %v784
    %v1028 = vpack.c.b16 %v791, %v788
    %v1029 = vpack.c.b16 %v792, %v789
    %v1030 = vpack.c.b16 %v793, %v790
    %v1031 = vpack.c.b16 %v797, %v794
    %v1032 = vpack.c.b16 %v798, %v795
    %v1033 = vpack.c.b16 %v799, %v796
    %v1034 = vpack.c.b16 %v803, %v800
    %v1035 = vpack.c.b16 %v804, %v801
    %v1036 = vpack.c.b16 %v805, %v802
    %v1037 = vpack.c.b16 %v809, %v806
    %v1038 = vpack.c.b16 %v810, %v807
    %v1039 = vpack.c.b16 %v811, %v808
    %v1040 = vpack.c.b16 %v815, %v812
    %v1041 = vpack.c.b16 %v816, %v813
    %v1042 = vpack.c.b16 %v817, %v814
    %v1043 = vpack.c.b16 %v821, %v818
    %v1044 = vpack.c.b16 %v822, %v819
    %v1045 = vpack.c.b16 %v823, %v820
    %v1046 = vpack.c.b16 %v827, %v824
    %v1047 = vpack.c.b16 %v828, %v825
    %v1048 = vpack.c.b16 %v829, %v826
    %v1049 = vpack.c.b16 %v833, %v830
    %v1050 = vpack.c.b16 %v834, %v831
    %v1051 = vpack.c.b16 %v835, %v832
    %v1052 = vpack.c.b16 %v839, %v836
    %v1053 = vpack.c.b16 %v840, %v837
    %v1054 = vpack.c.b16 %v841, %v838
    %v1055 = vpack.c.b16 %v845, %v842
    %v1056 = vpack.c.b16 %v846, %v843
    %v1057 = vpack.c.b16 %v847, %v844
    %v1058 = vpack.c.b16 %v851, %v848
    %v1059 = vpack.c.b16 %v852, %v849
    %v1060 = vpack.c.b16 %v853, %v850
    %v1061 = vpack.c.b16 %v857, %v854
    %v1062 = vpack.c.b16 %v858, %v855
    %v1063 = vpack.c.b16 %v859, %v856
    %v1064 = vpack.c.b16 %v863, %v860
    %v1065 = vpack.c.b16 %v864, %v861
    %v1066 = vpack.c.b16 %v865, %v862
    %v1067 = vpack.c.b16 %v869, %v866
    %v1068 = vpack.c.b16 %v870, %v867
    %v1069 = vpack.c.b16 %v871, %v868
    %v1070 = vpack.c.b16 %v875, %v872
    %v1071 = vpack.c.b16 %v876, %v873
    %v1072 = vpack.c.b16 %v877, %v874
    %v1073 = vpack.c.b16 %v881, %v878
    %v1074 = vpack.c.b16 %v882, %v879
    %v1075 = vpack.c.b16 %v883, %v880
    %v1076 = vpack.c.b16 %v887, %v884
    %v1077 = vpack.c.b16 %v888, %v885
    %v1078 = vpack.c.b16 %v889, %v886
    %v1079 = vpack.c.b16 %v893, %v890
    %v1080 = vpack.c.b16 %v894, %v891
    %v1081 = vpack.c.b16 %v895, %v892
    %v1082 = vpack.c.b16 %v899, %v896
    %v1083 = vpack.c.b16 %v900, %v897
    %v1084 = vpack.c.b16 %v901, %v898
    %v1085 = vpack.c.b16 %v905, %v902
    %v1086 = vpack.c.b16 %v906, %v903
    %v1087 = vpack.c.b16 %v907, %v904
    %v1088 = vpack.c.b16 %v911, %v908
    %v1089 = vpack.c.b16 %v912, %v909
    %v1090 = vpack.c.b16 %v913, %v910
    %v1091 = vpack.c.b16 %v917, %v914
    %v1092 = vpack.c.b16 %v918, %v915
    %v1093 = vpack.c.b16 %v919, %v916
    %v1094 = vpack.c.b16 %v923, %v920
    %v1095 = vpack.c.b16 %v924, %v921
    %v1096 = vpack.c.b16 %v925, %v922
    %v1097 = vpack.c.b16 %v929, %v926
    %v1098 = vpack.c.b16 %v930, %v927
    %v1099 = vpack.c.b16 %v931, %v928
    %v1100 = vpack.c.b16 %v935, %v932
    %v1101 = vpack.c.b16 %v936, %v933
    %v1102 = vpack.c.b16 %v937, %v934
    %v1103 = vpack.c.b16 %v941, %v938
    %v1104 = vpack.c.b16 %v942, %v939
    %v1105 = vpack.c.b16 %v943, %v940
    %v1106 = vpack.c.b16 %v947, %v944
    %v1107 = vpack.c.b16 %v948, %v945
    %v1108 = vpack.c.b16 %v949, %v946
    %v1109 = vpack.c.b16 %v953, %v950
    %v1110 = vpack.c.b16 %v954, %v951
    %v1111 = vpack.c.b16 %v955, %v952
    %v1112 = vpack.c.b16 %v959, %v956
    %v1113 = vpack.c.b16 %v960, %v957
    %v1114 = vpack.c.b16 %v961, %v958
    %v1115 = vpack.c.b16 %v965, %v962
    %v1116 = vpack.c.b16 %v966, %v963
    %v1117 = vpack.c.b16 %v967, %v964
    %v1118 = vpack.c.b16 %v971, %v968
    %v1119 = vpack.c.b16 %v972, %v969
    %v1120 = vpack.c.b16 %v973, %v970
    %v1121 = vpack.c.b16 %v977, %v974
    %v1122 = vpack.c.b16 %v978, %v975
    %v1123 = vpack.c.b16 %v979, %v976
    %1268 = vmatprep.subr.bf16.mxu0 %v981
    %1269 = vmatpush1.bf16.msra.mxu0 %v980
    %1270 = vmatprep.subr.bf16.mxu0 %v984
    %1271 = vmatpush1.bf16.msra.mxu0 %v983
    %1272 = vmatprep.subr.bf16.mxu0 %v987
    %1273 = vmatpush1.bf16.msra.mxu0 %v986
    %1274 = vmatprep.subr.bf16.mxu0 %v990
    %1275 = vmatpush1.bf16.msra.mxu0 %v989
    %1276 = vmatprep.subr.bf16.mxu0 %v993
    %1277 = vmatpush1.bf16.msra.mxu0 %v992
    %1278 = vmatprep.subr.bf16.mxu0 %v996
    %1279 = vmatpush1.bf16.msra.mxu0 %v995
    %1280 = vmatprep.subr.bf16.mxu0 %v999
    %1281 = vmatpush1.bf16.msra.mxu0 %v998
    %1282 = vmatprep.subr.bf16.mxu0 %v1002
    %1283 = vmatpush1.bf16.msra.mxu0 %v1001
    %1284 = vmatprep.subr.bf16.mxu0 %v1005
    %1285 = vmatpush1.bf16.msra.mxu0 %v1004
    %1286 = vmatprep.subr.bf16.mxu0 %v1008
    %1287 = vmatpush1.bf16.msra.mxu0 %v1007
    %1288 = vmatprep.subr.bf16.mxu0 %v1011
    %1289 = vmatpush1.bf16.msra.mxu0 %v1010
    %1290 = vmatprep.subr.bf16.mxu0 %v1014
    %1291 = vmatpush1.bf16.msra.mxu0 %v1013
    %1292 = vmatprep.subr.bf16.mxu0 %v1017
    %1293 = vmatpush1.bf16.msra.mxu0 %v1016
    %1294 = vmatprep.subr.bf16.mxu0 %v1020
    %1295 = vmatpush1.bf16.msra.mxu0 %v1019
    %1296 = vmatprep.subr.bf16.mxu0 %v1023
    %1297 = vmatpush1.bf16.msra.mxu0 %v1022
    %1298 = vmatprep.subr.bf16.mxu0 %v1026
    %1299 = vmatpush1.bf16.msra.mxu0 %v1025
    %1300 = vmatprep.mubr.bf16.mxu0 %v111
    %1301 = vmatmul.mubr.bf16.gmra.mrb[0].mxu0 %v110
    %v1302 = vpop.f32.mrb[0].mxu0
    %v1303 = vadd.f32 0.0, %v1302
    %v1304 = vpop.f32.mrb[0].mxu0
    %v1305 = vadd.f32 0.0, %v1304
    %v1306 = vpop.f32.mrb[0].mxu0
    %v1307 = vpop.f32.mrb[0].mxu0
    %1308 = vdwg.mxu0
    %1309 = vmatprep.subr.bf16.mxu0 %v1029
    %1310 = vmatpush1.bf16.msra.mxu0 %v1028
    %1311 = vmatprep.subr.bf16.mxu0 %v1032
    %1312 = vmatpush1.bf16.msra.mxu0 %v1031
    %1313 = vmatprep.subr.bf16.mxu0 %v1035
    %1314 = vmatpush1.bf16.msra.mxu0 %v1034
    %1315 = vmatprep.subr.bf16.mxu0 %v1038
    %1316 = vmatpush1.bf16.msra.mxu0 %v1037
    %1317 = vmatprep.subr.bf16.mxu0 %v1041
    %1318 = vmatpush1.bf16.msra.mxu0 %v1040
    %1319 = vmatprep.subr.bf16.mxu0 %v1044
    %1320 = vmatpush1.bf16.msra.mxu0 %v1043
    %1321 = vmatprep.subr.bf16.mxu0 %v1047
    %1322 = vmatpush1.bf16.msra.mxu0 %v1046
    %1323 = vmatprep.subr.bf16.mxu0 %v1050
    %1324 = vmatpush1.bf16.msra.mxu0 %v1049
    %1325 = vmatprep.subr.bf16.mxu0 %v1053
    %1326 = vmatpush1.bf16.msra.mxu0 %v1052
    %1327 = vmatprep.subr.bf16.mxu0 %v1056
    %1328 = vmatpush1.bf16.msra.mxu0 %v1055
    %1329 = vmatprep.subr.bf16.mxu0 %v1059
    %1330 = vmatpush1.bf16.msra.mxu0 %v1058
    %1331 = vmatprep.subr.bf16.mxu0 %v1062
    %1332 = vmatpush1.bf16.msra.mxu0 %v1061
    %1333 = vmatprep.subr.bf16.mxu0 %v1065
    %1334 = vmatpush1.bf16.msra.mxu0 %v1064
    %1335 = vmatprep.subr.bf16.mxu0 %v1068
    %1336 = vmatpush1.bf16.msra.mxu0 %v1067
    %1337 = vmatprep.subr.bf16.mxu0 %v1071
    %1338 = vmatpush1.bf16.msra.mxu0 %v1070
    %1339 = vmatprep.subr.bf16.mxu0 %v1074
    %1340 = vmatpush1.bf16.msra.mxu0 %v1073
    %1341 = vmatprep.mubr.bf16.mxu0 %v113
    %1342 = vmatmul.mubr.bf16.gmra.mrb[0].mxu0 %v112
    %v1343 = vpop.f32.mrb[0].mxu0
    %v1344 = vadd.f32 %v1303, %v1343
    %v1345 = vpop.f32.mrb[0].mxu0
    %v1346 = vadd.f32 %v1305, %v1345
    %v1347 = vpop.f32.mrb[0].mxu0
    %v1348 = vpop.f32.mrb[0].mxu0
    %1349 = vdwg.mxu0
    %1350 = vmatprep.subr.bf16.mxu0 %v1077
    %1351 = vmatpush1.bf16.msra.mxu0 %v1076
    %1352 = vmatprep.subr.bf16.mxu0 %v1080
    %1353 = vmatpush1.bf16.msra.mxu0 %v1079
    %1354 = vmatprep.subr.bf16.mxu0 %v1083
    %1355 = vmatpush1.bf16.msra.mxu0 %v1082
    %1356 = vmatprep.subr.bf16.mxu0 %v1086
    %1357 = vmatpush1.bf16.msra.mxu0 %v1085
    %1358 = vmatprep.subr.bf16.mxu0 %v1089
    %1359 = vmatpush1.bf16.msra.mxu0 %v1088
    %1360 = vmatprep.subr.bf16.mxu0 %v1092
    %1361 = vmatpush1.bf16.msra.mxu0 %v1091
    %1362 = vmatprep.subr.bf16.mxu0 %v1095
    %1363 = vmatpush1.bf16.msra.mxu0 %v1094
    %1364 = vmatprep.subr.bf16.mxu0 %v1098
    %1365 = vmatpush1.bf16.msra.mxu0 %v1097
    %1366 = vmatprep.subr.bf16.mxu0 %v1101
    %1367 = vmatpush1.bf16.msra.mxu0 %v1100
    %1368 = vmatprep.subr.bf16.mxu0 %v1104
    %1369 = vmatpush1.bf16.msra.mxu0 %v1103
    %1370 = vmatprep.subr.bf16.mxu0 %v1107
    %1371 = vmatpush1.bf16.msra.mxu0 %v1106
    %1372 = vmatprep.subr.bf16.mxu0 %v1110
    %1373 = vmatpush1.bf16.msra.mxu0 %v1109
    %1374 = vmatprep.subr.bf16.mxu0 %v1113
    %1375 = vmatpush1.bf16.msra.mxu0 %v1112
    %1376 = vmatprep.subr.bf16.mxu0 %v1116
    %1377 = vmatpush1.bf16.msra.mxu0 %v1115
    %1378 = vmatprep.subr.bf16.mxu0 %v1119
    %1379 = vmatpush1.bf16.msra.mxu0 %v1118
    %1380 = vmatprep.subr.bf16.mxu0 %v1122
    %1381 = vmatpush1.bf16.msra.mxu0 %v1121
    %1382 = vmatprep.mubr.bf16.mxu0 %v115
    %1383 = vmatmul.mubr.bf16.gmra.mrb[0].mxu0 %v114
    %v1384 = vpop.f32.mrb[0].mxu0
    %v1385 = vadd.f32 %v1344, %v1384
    %v1386 = vpop.f32.mrb[0].mxu0
    %v1387 = vadd.f32 %v1346, %v1386
    %v1388 = vpop.f32.mrb[0].mxu0
    %v1389 = vpop.f32.mrb[0].mxu0
    %1390 = vdwg.mxu0
    %1391 = vmatprep.subr.bf16.mxu0 0
    %1392 = vmatpush1.bf16.msra.mxu0 %v982
    %1393 = vmatprep.subr.bf16.mxu0 0
    %1394 = vmatpush1.bf16.msra.mxu0 %v985
    %1395 = vmatprep.subr.bf16.mxu0 0
    %1396 = vmatpush1.bf16.msra.mxu0 %v988
    %1397 = vmatprep.subr.bf16.mxu0 0
    %1398 = vmatpush1.bf16.msra.mxu0 %v991
    %1399 = vmatprep.subr.bf16.mxu0 0
    %1400 = vmatpush1.bf16.msra.mxu0 %v994
    %1401 = vmatprep.subr.bf16.mxu0 0
    %1402 = vmatpush1.bf16.msra.mxu0 %v997
    %1403 = vmatprep.subr.bf16.mxu0 0
    %1404 = vmatpush1.bf16.msra.mxu0 %v1000
    %1405 = vmatprep.subr.bf16.mxu0 0
    %1406 = vmatpush1.bf16.msra.mxu0 %v1003
    %1407 = vmatprep.subr.bf16.mxu0 0
    %1408 = vmatpush1.bf16.msra.mxu0 %v1006
    %1409 = vmatprep.subr.bf16.mxu0 0
    %1410 = vmatpush1.bf16.msra.mxu0 %v1009
    %1411 = vmatprep.subr.bf16.mxu0 0
    %1412 = vmatpush1.bf16.msra.mxu0 %v1012
    %1413 = vmatprep.subr.bf16.mxu0 0
    %1414 = vmatpush1.bf16.msra.mxu0 %v1015
    %1415 = vmatprep.subr.bf16.mxu0 0
    %1416 = vmatpush1.bf16.msra.mxu0 %v1018
    %1417 = vmatprep.subr.bf16.mxu0 0
    %1418 = vmatpush1.bf16.msra.mxu0 %v1021
    %1419 = vmatprep.subr.bf16.mxu0 0
    %1420 = vmatpush1.bf16.msra.mxu0 %v1024
    %1421 = vmatprep.subr.bf16.mxu0 0
    %1422 = vmatpush1.bf16.msra.mxu0 %v1027
    %1423 = vmatprep.mubr.bf16.mxu0 %v111
    %1424 = vmatmul.mubr.bf16.gmra.mrb[0].mxu0 %v110
    %v1425 = vpop.f32.mrb[0].mxu0
    %v1426 = vadd.f32 0.0, %v1425
    %v1427 = vpop.f32.mrb[0].mxu0
    %v1428 = vpop.f32.mrb[0].mxu0
    %v1429 = vpop.f32.mrb[0].mxu0
    %1430 = vdwg.mxu0
    %1431 = vmatprep.subr.bf16.mxu0 0
    %1432 = vmatpush1.bf16.msra.mxu0 %v1030
    %1433 = vmatprep.subr.bf16.mxu0 0
    %1434 = vmatpush1.bf16.msra.mxu0 %v1033
    %1435 = vmatprep.subr.bf16.mxu0 0
    %1436 = vmatpush1.bf16.msra.mxu0 %v1036
    %1437 = vmatprep.subr.bf16.mxu0 0
    %1438 = vmatpush1.bf16.msra.mxu0 %v1039
    %1439 = vmatprep.subr.bf16.mxu0 0
    %1440 = vmatpush1.bf16.msra.mxu0 %v1042
    %1441 = vmatprep.subr.bf16.mxu0 0
    %1442 = vmatpush1.bf16.msra.mxu0 %v1045
    %1443 = vmatprep.subr.bf16.mxu0 0
    %1444 = vmatpush1.bf16.msra.mxu0 %v1048
    %1445 = vmatprep.subr.bf16.mxu0 0
    %1446 = vmatpush1.bf16.msra.mxu0 %v1051
    %1447 = vmatprep.subr.bf16.mxu0 0
    %1448 = vmatpush1.bf16.msra.mxu0 %v1054
    %1449 = vmatprep.subr.bf16.mxu0 0
    %1450 = vmatpush1.bf16.msra.mxu0 %v1057
    %1451 = vmatprep.subr.bf16.mxu0 0
    %1452 = vmatpush1.bf16.msra.mxu0 %v1060
    %1453 = vmatprep.subr.bf16.mxu0 0
    %1454 = vmatpush1.bf16.msra.mxu0 %v1063
    %1455 = vmatprep.subr.bf16.mxu0 0
    %1456 = vmatpush1.bf16.msra.mxu0 %v1066
    %1457 = vmatprep.subr.bf16.mxu0 0
    %1458 = vmatpush1.bf16.msra.mxu0 %v1069
    %1459 = vmatprep.subr.bf16.mxu0 0
    %1460 = vmatpush1.bf16.msra.mxu0 %v1072
    %1461 = vmatprep.subr.bf16.mxu0 0
    %1462 = vmatpush1.bf16.msra.mxu0 %v1075
    %1463 = vmatprep.mubr.bf16.mxu0 %v113
    %1464 = vmatmul.mubr.bf16.gmra.mrb[0].mxu0 %v112
    %v1465 = vpop.f32.mrb[0].mxu0
    %v1466 = vadd.f32 %v1426, %v1465
    %v1467 = vpop.f32.mrb[0].mxu0
    %v1468 = vpop.f32.mrb[0].mxu0
    %v1469 = vpop.f32.mrb[0].mxu0
    %1470 = vdwg.mxu0
    %1471 = vmatprep.subr.bf16.mxu0 0
    %1472 = vmatpush1.bf16.msra.mxu0 %v1078
    %1473 = vmatprep.subr.bf16.mxu0 0
    %1474 = vmatpush1.bf16.msra.mxu0 %v1081
    %1475 = vmatprep.subr.bf16.mxu0 0
    %1476 = vmatpush1.bf16.msra.mxu0 %v1084
    %1477 = vmatprep.subr.bf16.mxu0 0
    %1478 = vmatpush1.bf16.msra.mxu0 %v1087
    %1479 = vmatprep.subr.bf16.mxu0 0
    %1480 = vmatpush1.bf16.msra.mxu0 %v1090
    %1481 = vmatprep.subr.bf16.mxu0 0
    %1482 = vmatpush1.bf16.msra.mxu0 %v1093
    %1483 = vmatprep.subr.bf16.mxu0 0
    %1484 = vmatpush1.bf16.msra.mxu0 %v1096
    %1485 = vmatprep.subr.bf16.mxu0 0
    %1486 = vmatpush1.bf16.msra.mxu0 %v1099
    %1487 = vmatprep.subr.bf16.mxu0 0
    %1488 = vmatpush1.bf16.msra.mxu0 %v1102
    %1489 = vmatprep.subr.bf16.mxu0 0
    %1490 = vmatpush1.bf16.msra.mxu0 %v1105
    %1491 = vmatprep.subr.bf16.mxu0 0
    %1492 = vmatpush1.bf16.msra.mxu0 %v1108
    %1493 = vmatprep.subr.bf16.mxu0 0
    %1494 = vmatpush1.bf16.msra.mxu0 %v1111
    %1495 = vmatprep.subr.bf16.mxu0 0
    %1496 = vmatpush1.bf16.msra.mxu0 %v1114
    %1497 = vmatprep.subr.bf16.mxu0 0
    %1498 = vmatpush1.bf16.msra.mxu0 %v1117
    %1499 = vmatprep.subr.bf16.mxu0 0
    %1500 = vmatpush1.bf16.msra.mxu0 %v1120
    %1501 = vmatprep.subr.bf16.mxu0 0
    %1502 = vmatpush1.bf16.msra.mxu0 %v1123
    %1503 = vmatprep.mubr.bf16.mxu0 %v115
    %1504 = vmatmul.mubr.bf16.gmra.mrb[0].mxu0 %v114
    %v1505 = vpop.f32.mrb[0].mxu0
    %v1506 = vadd.f32 %v1466, %v1505
    %v1507 = vpop.f32.mrb[0].mxu0
    %v1508 = vpop.f32.mrb[0].mxu0
    %v1509 = vpop.f32.mrb[0].mxu0
    %1510 = vdwg.mxu0
    %v1703 = vunpack.c.l.b16 %v116
    %v1704 = vunpack.c.h.b16 %v116
    %v1705 = vunpack.c.l.b16 %v117
    %v1706 = vunpack.c.l.b16 %v118
    %v1707 = vunpack.c.h.b16 %v118
    %v1708 = vunpack.c.l.b16 %v119
    %v1709 = vunpack.c.l.b16 %v120
    %v1710 = vunpack.c.h.b16 %v120
    %v1711 = vunpack.c.l.b16 %v121
    %v1712 = vunpack.c.l.b16 %v122
    %v1713 = vunpack.c.h.b16 %v122
    %v1714 = vunpack.c.l.b16 %v123
    %v1715 = vunpack.c.l.b16 %v124
    %v1716 = vunpack.c.h.b16 %v124
    %v1717 = vunpack.c.l.b16 %v125
    %v1718 = vunpack.c.l.b16 %v126
    %v1719 = vunpack.c.h.b16 %v126
    %v1720 = vunpack.c.l.b16 %v127
    %v1721 = vunpack.c.l.b16 %v128
    %v1722 = vunpack.c.h.b16 %v128
    %v1723 = vunpack.c.l.b16 %v129
    %v1724 = vunpack.c.l.b16 %v130
    %v1725 = vunpack.c.h.b16 %v130
    %v1726 = vunpack.c.l.b16 %v131
    %v1727 = vunpack.c.l.b16 %v132
    %v1728 = vunpack.c.h.b16 %v132
    %v1729 = vunpack.c.l.b16 %v133
    %v1730 = vunpack.c.l.b16 %v134
    %v1731 = vunpack.c.h.b16 %v134
    %v1732 = vunpack.c.l.b16 %v135
    %v1733 = vunpack.c.l.b16 %v136
    %v1734 = vunpack.c.h.b16 %v136
    %v1735 = vunpack.c.l.b16 %v137
    %v1736 = vunpack.c.l.b16 %v138
    %v1737 = vunpack.c.h.b16 %v138
    %v1738 = vunpack.c.l.b16 %v139
    %v1739 = vunpack.c.l.b16 %v140
    %v1740 = vunpack.c.h.b16 %v140
    %v1741 = vunpack.c.l.b16 %v141
    %v1742 = vunpack.c.l.b16 %v142
    %v1743 = vunpack.c.h.b16 %v142
    %v1744 = vunpack.c.l.b16 %v143
    %v1745 = vunpack.c.l.b16 %v144
    %v1746 = vunpack.c.h.b16 %v144
    %v1747 = vunpack.c.l.b16 %v145
    %v1748 = vunpack.c.l.b16 %v146
    %v1749 = vunpack.c.h.b16 %v146
    %v1750 = vunpack.c.l.b16 %v147
    %v1751 = vunpack.c.l.b16 %v148
    %v1752 = vunpack.c.h.b16 %v148
    %v1753 = vunpack.c.l.b16 %v149
    %v1754 = vunpack.c.l.b16 %v150
    %v1755 = vunpack.c.h.b16 %v150
    %v1756 = vunpack.c.l.b16 %v151
    %v1757 = vunpack.c.l.b16 %v152
    %v1758 = vunpack.c.h.b16 %v152
    %v1759 = vunpack.c.l.b16 %v153
    %v1760 = vunpack.c.l.b16 %v154
    %v1761 = vunpack.c.h.b16 %v154
    %v1762 = vunpack.c.l.b16 %v155
    %v1763 = vunpack.c.l.b16 %v156
    %v1764 = vunpack.c.h.b16 %v156
    %v1765 = vunpack.c.l.b16 %v157
    %v1766 = vunpack.c.l.b16 %v158
    %v1767 = vunpack.c.h.b16 %v158
    %v1768 = vunpack.c.l.b16 %v159
    %v1769 = vunpack.c.l.b16 %v160
    %v1770 = vunpack.c.h.b16 %v160
    %v1771 = vunpack.c.l.b16 %v161
    %v1772 = vunpack.c.l.b16 %v162
    %v1773 = vunpack.c.h.b16 %v162
    %v1774 = vunpack.c.l.b16 %v163
    %v1775 = vunpack.c.l.b16 %v164
    %v1776 = vunpack.c.h.b16 %v164
    %v1777 = vunpack.c.l.b16 %v165
    %v1778 = vunpack.c.l.b16 %v166
    %v1779 = vunpack.c.h.b16 %v166
    %v1780 = vunpack.c.l.b16 %v167
    %v1781 = vunpack.c.l.b16 %v168
    %v1782 = vunpack.c.h.b16 %v168
    %v1783 = vunpack.c.l.b16 %v169
    %v1784 = vunpack.c.l.b16 %v170
    %v1785 = vunpack.c.h.b16 %v170
    %v1786 = vunpack.c.l.b16 %v171
    %v1787 = vunpack.c.l.b16 %v172
    %v1788 = vunpack.c.h.b16 %v172
    %v1789 = vunpack.c.l.b16 %v173
    %v1790 = vunpack.c.l.b16 %v174
    %v1791 = vunpack.c.h.b16 %v174
    %v1792 = vunpack.c.l.b16 %v175
    %v1793 = vunpack.c.l.b16 %v176
    %v1794 = vunpack.c.h.b16 %v176
    %v1795 = vunpack.c.l.b16 %v177
    %v1796 = vunpack.c.l.b16 %v178
    %v1797 = vunpack.c.h.b16 %v178
    %v1798 = vunpack.c.l.b16 %v179
    %v1799 = vunpack.c.l.b16 %v180
    %v1800 = vunpack.c.h.b16 %v180
    %v1801 = vunpack.c.l.b16 %v181
    %v1802 = vunpack.c.l.b16 %v182
    %v1803 = vunpack.c.h.b16 %v182
    %v1804 = vunpack.c.l.b16 %v183
    %v1805 = vunpack.c.l.b16 %v184
    %v1806 = vunpack.c.h.b16 %v184
    %v1807 = vunpack.c.l.b16 %v185
    %v1808 = vunpack.c.l.b16 %v186
    %v1809 = vunpack.c.h.b16 %v186
    %v1810 = vunpack.c.l.b16 %v187
    %v1811 = vunpack.c.l.b16 %v188
    %v1812 = vunpack.c.h.b16 %v188
    %v1813 = vunpack.c.l.b16 %v189
    %v1814 = vunpack.c.l.b16 %v190
    %v1815 = vunpack.c.h.b16 %v190
    %v1816 = vunpack.c.l.b16 %v191
    %v1817 = vunpack.c.l.b16 %v192
    %v1818 = vunpack.c.h.b16 %v192
    %v1819 = vunpack.c.l.b16 %v193
    %v1820 = vunpack.c.l.b16 %v194
    %v1821 = vunpack.c.h.b16 %v194
    %v1822 = vunpack.c.l.b16 %v195
    %v1823 = vunpack.c.l.b16 %v196
    %v1824 = vunpack.c.h.b16 %v196
    %v1825 = vunpack.c.l.b16 %v197
    %v1826 = vunpack.c.l.b16 %v198
    %v1827 = vunpack.c.h.b16 %v198
    %v1828 = vunpack.c.l.b16 %v199
    %v1829 = vunpack.c.l.b16 %v200
    %v1830 = vunpack.c.h.b16 %v200
    %v1831 = vunpack.c.l.b16 %v201
    %v1832 = vunpack.c.l.b16 %v202
    %v1833 = vunpack.c.h.b16 %v202
    %v1834 = vunpack.c.l.b16 %v203
    %v1835 = vunpack.c.l.b16 %v204
    %v1836 = vunpack.c.h.b16 %v204
    %v1837 = vunpack.c.l.b16 %v205
    %v1838 = vunpack.c.l.b16 %v206
    %v1839 = vunpack.c.h.b16 %v206
    %v1840 = vunpack.c.l.b16 %v207
    %v1841 = vunpack.c.l.b16 %v208
    %v1842 = vunpack.c.h.b16 %v208
    %v1843 = vunpack.c.l.b16 %v209
    %v1844 = vunpack.c.l.b16 %v210
    %v1845 = vunpack.c.h.b16 %v210
    %v1846 = vunpack.c.l.b16 %v211
    %v1847 = vunpack.c.l.b16 %v212
    %v1848 = vunpack.c.h.b16 %v212
    %v1849 = vunpack.c.l.b16 %v213
    %v1850 = vunpack.c.l.b16 %v214
    %v1851 = vunpack.c.h.b16 %v214
    %v1852 = vunpack.c.l.b16 %v215
    %v1853 = vunpack.c.l.b16 %v216
    %v1854 = vunpack.c.h.b16 %v216
    %v1855 = vunpack.c.l.b16 %v217
    %v1856 = vunpack.c.l.b16 %v218
    %v1857 = vunpack.c.h.b16 %v218
    %v1858 = vunpack.c.l.b16 %v219
    %v1859 = vunpack.c.l.b16 %v220
    %v1860 = vunpack.c.h.b16 %v220
    %v1861 = vunpack.c.l.b16 %v221
    %v1862 = vunpack.c.l.b16 %v222
    %v1863 = vunpack.c.h.b16 %v222
    %v1864 = vunpack.c.l.b16 %v223
    %v1865 = vunpack.c.l.b16 %v224
    %v1866 = vunpack.c.h.b16 %v224
    %v1867 = vunpack.c.l.b16 %v225
    %v1868 = vunpack.c.l.b16 %v226
    %v1869 = vunpack.c.h.b16 %v226
    %v1870 = vunpack.c.l.b16 %v227
    %v1871 = vunpack.c.l.b16 %v228
    %v1872 = vunpack.c.h.b16 %v228
    %v1873 = vunpack.c.l.b16 %v229
    %v1874 = vunpack.c.l.b16 %v230
    %v1875 = vunpack.c.h.b16 %v230
    %v1876 = vunpack.c.l.b16 %v231
    %v1877 = vunpack.c.l.b16 %v232
    %v1878 = vunpack.c.h.b16 %v232
    %v1879 = vunpack.c.l.b16 %v233
    %v1880 = vunpack.c.l.b16 %v234
    %v1881 = vunpack.c.h.b16 %v234
    %v1882 = vunpack.c.l.b16 %v235
    %v1883 = vunpack.c.l.b16 %v236
    %v1884 = vunpack.c.h.b16 %v236
    %v1885 = vunpack.c.l.b16 %v237
    %v1886 = vunpack.c.l.b16 %v238
    %v1887 = vunpack.c.h.b16 %v238
    %v1888 = vunpack.c.l.b16 %v239
    %v1889 = vunpack.c.l.b16 %v240
    %v1890 = vunpack.c.h.b16 %v240
    %v1891 = vunpack.c.l.b16 %v241
    %v1892 = vunpack.c.l.b16 %v242
    %v1893 = vunpack.c.h.b16 %v242
    %v1894 = vunpack.c.l.b16 %v243
    %v1895 = vunpack.c.l.b16 %v244
    %v1896 = vunpack.c.h.b16 %v244
    %v1897 = vunpack.c.l.b16 %v245
    %v1898 = vunpack.c.l.b16 %v246
    %v1899 = vunpack.c.h.b16 %v246
    %v1900 = vunpack.c.l.b16 %v247
    %v1901 = vunpack.c.l.b16 %v248
    %v1902 = vunpack.c.h.b16 %v248
    %v1903 = vunpack.c.l.b16 %v249
    %v1904 = vunpack.c.l.b16 %v250
    %v1905 = vunpack.c.h.b16 %v250
    %v1906 = vunpack.c.l.b16 %v251
    %v1907 = vunpack.c.l.b16 %v252
    %v1908 = vunpack.c.h.b16 %v252
    %v1909 = vunpack.c.l.b16 %v253
    %v1910 = vunpack.c.l.b16 %v254
    %v1911 = vunpack.c.h.b16 %v254
    %v1912 = vunpack.c.l.b16 %v255
    %v1913 = vunpack.c.l.b16 %v256
    %v1914 = vunpack.c.h.b16 %v256
    %v1915 = vunpack.c.l.b16 %v257
    %v1916 = vunpack.c.l.b16 %v258
    %v1917 = vunpack.c.h.b16 %v258
    %v1918 = vunpack.c.l.b16 %v259
    %v1919 = vunpack.c.l.b16 %v260
    %v1920 = vunpack.c.h.b16 %v260
    %v1921 = vunpack.c.l.b16 %v261
    %v1922 = vunpack.c.l.b16 %v262
    %v1923 = vunpack.c.h.b16 %v262
    %v1924 = vunpack.c.l.b16 %v263
    %v1925 = vunpack.c.l.b16 %v264
    %v1926 = vunpack.c.h.b16 %v264
    %v1927 = vunpack.c.l.b16 %v265
    %v1928 = vunpack.c.l.b16 %v266
    %v1929 = vunpack.c.h.b16 %v266
    %v1930 = vunpack.c.l.b16 %v267
    %v1931 = vunpack.c.l.b16 %v268
    %v1932 = vunpack.c.h.b16 %v268
    %v1933 = vunpack.c.l.b16 %v269
    %v1934 = vunpack.c.l.b16 %v270
    %v1935 = vunpack.c.h.b16 %v270
    %v1936 = vunpack.c.l.b16 %v271
    %v1937 = vunpack.c.l.b16 %v272
    %v1938 = vunpack.c.h.b16 %v272
    %v1939 = vunpack.c.l.b16 %v273
    %v1940 = vunpack.c.l.b16 %v274
    %v1941 = vunpack.c.h.b16 %v274
    %v1942 = vunpack.c.l.b16 %v275
    %v1943 = vunpack.c.l.b16 %v276
    %v1944 = vunpack.c.h.b16 %v276
    %v1945 = vunpack.c.l.b16 %v277
    %v1946 = vunpack.c.l.b16 %v278
    %v1947 = vunpack.c.h.b16 %v278
    %v1948 = vunpack.c.l.b16 %v279
    %v1949 = vunpack.c.l.b16 %v280
    %v1950 = vunpack.c.h.b16 %v280
    %v1951 = vunpack.c.l.b16 %v281
    %v1952 = vunpack.c.l.b16 %v282
    %v1953 = vunpack.c.h.b16 %v282
    %v1954 = vunpack.c.l.b16 %v283
    %v1955 = vunpack.c.l.b16 %v284
    %v1956 = vunpack.c.h.b16 %v284
    %v1957 = vunpack.c.l.b16 %v285
    %v1958 = vunpack.c.l.b16 %v286
    %v1959 = vunpack.c.h.b16 %v286
    %v1960 = vunpack.c.l.b16 %v287
    %v1961 = vunpack.c.l.b16 %v288
    %v1962 = vunpack.c.h.b16 %v288
    %v1963 = vunpack.c.l.b16 %v289
    %v1964 = vunpack.c.l.b16 %v290
    %v1965 = vunpack.c.h.b16 %v290
    %v1966 = vunpack.c.l.b16 %v291
    %v1967 = vunpack.c.l.b16 %v292
    %v1968 = vunpack.c.h.b16 %v292
    %v1969 = vunpack.c.l.b16 %v293
    %v1970 = vunpack.c.l.b16 %v294
    %v1971 = vunpack.c.h.b16 %v294
    %v1972 = vunpack.c.l.b16 %v295
    %v1973 = vunpack.c.l.b16 %v296
    %v1974 = vunpack.c.h.b16 %v296
    %v1975 = vunpack.c.l.b16 %v297
    %v1976 = vunpack.c.l.b16 %v298
    %v1977 = vunpack.c.h.b16 %v298
    %v1978 = vunpack.c.l.b16 %v299
    %v1979 = vunpack.c.l.b16 %v300
    %v1980 = vunpack.c.h.b16 %v300
    %v1981 = vunpack.c.l.b16 %v301
    %v1982 = vunpack.c.l.b16 %v302
    %v1983 = vunpack.c.h.b16 %v302
    %v1984 = vunpack.c.l.b16 %v303
    %v1985 = vunpack.c.l.b16 %v304
    %v1986 = vunpack.c.h.b16 %v304
    %v1987 = vunpack.c.l.b16 %v305
    %v1988 = vunpack.c.l.b16 %v306
    %v1989 = vunpack.c.h.b16 %v306
    %v1990 = vunpack.c.l.b16 %v307
    %v1991 = vpack.c.b16 %v1706, %v1703
    %v1992 = vpack.c.b16 %v1707, %v1704
    %v1993 = vpack.c.b16 %v1708, %v1705
    %v1994 = vpack.c.b16 %v1712, %v1709
    %v1995 = vpack.c.b16 %v1713, %v1710
    %v1996 = vpack.c.b16 %v1714, %v1711
    %v1997 = vpack.c.b16 %v1718, %v1715
    %v1998 = vpack.c.b16 %v1719, %v1716
    %v1999 = vpack.c.b16 %v1720, %v1717
    %v2000 = vpack.c.b16 %v1724, %v1721
    %v2001 = vpack.c.b16 %v1725, %v1722
    %v2002 = vpack.c.b16 %v1726, %v1723
    %v2003 = vpack.c.b16 %v1730, %v1727
    %v2004 = vpack.c.b16 %v1731, %v1728
    %v2005 = vpack.c.b16 %v1732, %v1729
    %v2006 = vpack.c.b16 %v1736, %v1733
    %v2007 = vpack.c.b16 %v1737, %v1734
    %v2008 = vpack.c.b16 %v1738, %v1735
    %v2009 = vpack.c.b16 %v1742, %v1739
    %v2010 = vpack.c.b16 %v1743, %v1740
    %v2011 = vpack.c.b16 %v1744, %v1741
    %v2012 = vpack.c.b16 %v1748, %v1745
    %v2013 = vpack.c.b16 %v1749, %v1746
    %v2014 = vpack.c.b16 %v1750, %v1747
    %v2015 = vpack.c.b16 %v1754, %v1751
    %v2016 = vpack.c.b16 %v1755, %v1752
    %v2017 = vpack.c.b16 %v1756, %v1753
    %v2018 = vpack.c.b16 %v1760, %v1757
    %v2019 = vpack.c.b16 %v1761, %v1758
    %v2020 = vpack.c.b16 %v1762, %v1759
    %v2021 = vpack.c.b16 %v1766, %v1763
    %v2022 = vpack.c.b16 %v1767, %v1764
    %v2023 = vpack.c.b16 %v1768, %v1765
    %v2024 = vpack.c.b16 %v1772, %v1769
    %v2025 = vpack.c.b16 %v1773, %v1770
    %v2026 = vpack.c.b16 %v1774, %v1771
    %v2027 = vpack.c.b16 %v1778, %v1775
    %v2028 = vpack.c.b16 %v1779, %v1776
    %v2029 = vpack.c.b16 %v1780, %v1777
    %v2030 = vpack.c.b16 %v1784, %v1781
    %v2031 = vpack.c.b16 %v1785, %v1782
    %v2032 = vpack.c.b16 %v1786, %v1783
    %v2033 = vpack.c.b16 %v1790, %v1787
    %v2034 = vpack.c.b16 %v1791, %v1788
    %v2035 = vpack.c.b16 %v1792, %v1789
    %v2036 = vpack.c.b16 %v1796, %v1793
    %v2037 = vpack.c.b16 %v1797, %v1794
    %v2038 = vpack.c.b16 %v1798, %v1795
    %v2039 = vpack.c.b16 %v1802, %v1799
    %v2040 = vpack.c.b16 %v1803, %v1800
    %v2041 = vpack.c.b16 %v1804, %v1801
    %v2042 = vpack.c.b16 %v1808, %v1805
    %v2043 = vpack.c.b16 %v1809, %v1806
    %v2044 = vpack.c.b16 %v1810, %v1807
    %v2045 = vpack.c.b16 %v1814, %v1811
    %v2046 = vpack.c.b16 %v1815, %v1812
    %v2047 = vpack.c.b16 %v1816, %v1813
    %v2048 = vpack.c.b16 %v1820, %v1817
    %v2049 = vpack.c.b16 %v1821, %v1818
    %v2050 = vpack.c.b16 %v1822, %v1819
    %v2051 = vpack.c.b16 %v1826, %v1823
    %v2052 = vpack.c.b16 %v1827, %v1824
    %v2053 = vpack.c.b16 %v1828, %v1825
    %v2054 = vpack.c.b16 %v1832, %v1829
    %v2055 = vpack.c.b16 %v1833, %v1830
    %v2056 = vpack.c.b16 %v1834, %v1831
    %v2057 = vpack.c.b16 %v1838, %v1835
    %v2058 = vpack.c.b16 %v1839, %v1836
    %v2059 = vpack.c.b16 %v1840, %v1837
    %v2060 = vpack.c.b16 %v1844, %v1841
    %v2061 = vpack.c.b16 %v1845, %v1842
    %v2062 = vpack.c.b16 %v1846, %v1843
    %v2063 = vpack.c.b16 %v1850, %v1847
    %v2064 = vpack.c.b16 %v1851, %v1848
    %v2065 = vpack.c.b16 %v1852, %v1849
    %v2066 = vpack.c.b16 %v1856, %v1853
    %v2067 = vpack.c.b16 %v1857, %v1854
    %v2068 = vpack.c.b16 %v1858, %v1855
    %v2069 = vpack.c.b16 %v1862, %v1859
    %v2070 = vpack.c.b16 %v1863, %v1860
    %v2071 = vpack.c.b16 %v1864, %v1861
    %v2072 = vpack.c.b16 %v1868, %v1865
    %v2073 = vpack.c.b16 %v1869, %v1866
    %v2074 = vpack.c.b16 %v1870, %v1867
    %v2075 = vpack.c.b16 %v1874, %v1871
    %v2076 = vpack.c.b16 %v1875, %v1872
    %v2077 = vpack.c.b16 %v1876, %v1873
    %v2078 = vpack.c.b16 %v1880, %v1877
    %v2079 = vpack.c.b16 %v1881, %v1878
    %v2080 = vpack.c.b16 %v1882, %v1879
    %v2081 = vpack.c.b16 %v1886, %v1883
    %v2082 = vpack.c.b16 %v1887, %v1884
    %v2083 = vpack.c.b16 %v1888, %v1885
    %v2084 = vpack.c.b16 %v1892, %v1889
    %v2085 = vpack.c.b16 %v1893, %v1890
    %v2086 = vpack.c.b16 %v1894, %v1891
    %v2087 = vpack.c.b16 %v1898, %v1895
    %v2088 = vpack.c.b16 %v1899, %v1896
    %v2089 = vpack.c.b16 %v1900, %v1897
    %v2090 = vpack.c.b16 %v1904, %v1901
    %v2091 = vpack.c.b16 %v1905, %v1902
    %v2092 = vpack.c.b16 %v1906, %v1903
    %v2093 = vpack.c.b16 %v1910, %v1907
    %v2094 = vpack.c.b16 %v1911, %v1908
    %v2095 = vpack.c.b16 %v1912, %v1909
    %v2096 = vpack.c.b16 %v1916, %v1913
    %v2097 = vpack.c.b16 %v1917, %v1914
    %v2098 = vpack.c.b16 %v1918, %v1915
    %v2099 = vpack.c.b16 %v1922, %v1919
    %v2100 = vpack.c.b16 %v1923, %v1920
    %v2101 = vpack.c.b16 %v1924, %v1921
    %v2102 = vpack.c.b16 %v1928, %v1925
    %v2103 = vpack.c.b16 %v1929, %v1926
    %v2104 = vpack.c.b16 %v1930, %v1927
    %v2105 = vpack.c.b16 %v1934, %v1931
    %v2106 = vpack.c.b16 %v1935, %v1932
    %v2107 = vpack.c.b16 %v1936, %v1933
    %v2108 = vpack.c.b16 %v1940, %v1937
    %v2109 = vpack.c.b16 %v1941, %v1938
    %v2110 = vpack.c.b16 %v1942, %v1939
    %v2111 = vpack.c.b16 %v1946, %v1943
    %v2112 = vpack.c.b16 %v1947, %v1944
    %v2113 = vpack.c.b16 %v1948, %v1945
    %v2114 = vpack.c.b16 %v1952, %v1949
    %v2115 = vpack.c.b16 %v1953, %v1950
    %v2116 = vpack.c.b16 %v1954, %v1951
    %v2117 = vpack.c.b16 %v1958, %v1955
    %v2118 = vpack.c.b16 %v1959, %v1956
    %v2119 = vpack.c.b16 %v1960, %v1957
    %v2120 = vpack.c.b16 %v1964, %v1961
    %v2121 = vpack.c.b16 %v1965, %v1962
    %v2122 = vpack.c.b16 %v1966, %v1963
    %v2123 = vpack.c.b16 %v1970, %v1967
    %v2124 = vpack.c.b16 %v1971, %v1968
    %v2125 = vpack.c.b16 %v1972, %v1969
    %v2126 = vpack.c.b16 %v1976, %v1973
    %v2127 = vpack.c.b16 %v1977, %v1974
    %v2128 = vpack.c.b16 %v1978, %v1975
    %v2129 = vpack.c.b16 %v1982, %v1979
    %v2130 = vpack.c.b16 %v1983, %v1980
    %v2131 = vpack.c.b16 %v1984, %v1981
    %v2132 = vpack.c.b16 %v1988, %v1985
    %v2133 = vpack.c.b16 %v1989, %v1986
    %v2134 = vpack.c.b16 %v1990, %v1987
    %2279 = vmatprep.subr.bf16.mxu0 %v1992
    %2280 = vmatpush1.bf16.msra.mxu0 %v1991
    %2281 = vmatprep.subr.bf16.mxu0 %v1995
    %2282 = vmatpush1.bf16.msra.mxu0 %v1994
    %2283 = vmatprep.subr.bf16.mxu0 %v1998
    %2284 = vmatpush1.bf16.msra.mxu0 %v1997
    %2285 = vmatprep.subr.bf16.mxu0 %v2001
    %2286 = vmatpush1.bf16.msra.mxu0 %v2000
    %2287 = vmatprep.subr.bf16.mxu0 %v2004
    %2288 = vmatpush1.bf16.msra.mxu0 %v2003
    %2289 = vmatprep.subr.bf16.mxu0 %v2007
    %2290 = vmatpush1.bf16.msra.mxu0 %v2006
    %2291 = vmatprep.subr.bf16.mxu0 %v2010
    %2292 = vmatpush1.bf16.msra.mxu0 %v2009
    %2293 = vmatprep.subr.bf16.mxu0 %v2013
    %2294 = vmatpush1.bf16.msra.mxu0 %v2012
    %2295 = vmatprep.subr.bf16.mxu0 %v2016
    %2296 = vmatpush1.bf16.msra.mxu0 %v2015
    %2297 = vmatprep.subr.bf16.mxu0 %v2019
    %2298 = vmatpush1.bf16.msra.mxu0 %v2018
    %2299 = vmatprep.subr.bf16.mxu0 %v2022
    %2300 = vmatpush1.bf16.msra.mxu0 %v2021
    %2301 = vmatprep.subr.bf16.mxu0 %v2025
    %2302 = vmatpush1.bf16.msra.mxu0 %v2024
    %2303 = vmatprep.subr.bf16.mxu0 %v2028
    %2304 = vmatpush1.bf16.msra.mxu0 %v2027
    %2305 = vmatprep.subr.bf16.mxu0 %v2031
    %2306 = vmatpush1.bf16.msra.mxu0 %v2030
    %2307 = vmatprep.subr.bf16.mxu0 %v2034
    %2308 = vmatpush1.bf16.msra.mxu0 %v2033
    %2309 = vmatprep.subr.bf16.mxu0 %v2037
    %2310 = vmatpush1.bf16.msra.mxu0 %v2036
    %2311 = vmatprep.mubr.bf16.mxu0 %v99
    %2312 = vmatmul.mubr.bf16.gmra.mrb[0].mxu0 %v98
    %v2313 = vpop.f32.mrb[0].mxu0
    %v2314 = vadd.f32 %v1385, %v2313
    %v2315 = vpop.f32.mrb[0].mxu0
    %v2316 = vadd.f32 %v1387, %v2315
    %v2317 = vpop.f32.mrb[0].mxu0
    %v2318 = vpop.f32.mrb[0].mxu0
    %2319 = vdwg.mxu0
    %2320 = vmatprep.subr.bf16.mxu0 %v2040
    %2321 = vmatpush1.bf16.msra.mxu0 %v2039
    %2322 = vmatprep.subr.bf16.mxu0 %v2043
    %2323 = vmatpush1.bf16.msra.mxu0 %v2042
    %2324 = vmatprep.subr.bf16.mxu0 %v2046
    %2325 = vmatpush1.bf16.msra.mxu0 %v2045
    %2326 = vmatprep.subr.bf16.mxu0 %v2049
    %2327 = vmatpush1.bf16.msra.mxu0 %v2048
    %2328 = vmatprep.subr.bf16.mxu0 %v2052
    %2329 = vmatpush1.bf16.msra.mxu0 %v2051
    %2330 = vmatprep.subr.bf16.mxu0 %v2055
    %2331 = vmatpush1.bf16.msra.mxu0 %v2054
    %2332 = vmatprep.subr.bf16.mxu0 %v2058
    %2333 = vmatpush1.bf16.msra.mxu0 %v2057
    %2334 = vmatprep.subr.bf16.mxu0 %v2061
    %2335 = vmatpush1.bf16.msra.mxu0 %v2060
    %2336 = vmatprep.subr.bf16.mxu0 %v2064
    %2337 = vmatpush1.bf16.msra.mxu0 %v2063
    %2338 = vmatprep.subr.bf16.mxu0 %v2067
    %2339 = vmatpush1.bf16.msra.mxu0 %v2066
    %2340 = vmatprep.subr.bf16.mxu0 %v2070
    %2341 = vmatpush1.bf16.msra.mxu0 %v2069
    %2342 = vmatprep.subr.bf16.mxu0 %v2073
    %2343 = vmatpush1.bf16.msra.mxu0 %v2072
    %2344 = vmatprep.subr.bf16.mxu0 %v2076
    %2345 = vmatpush1.bf16.msra.mxu0 %v2075
    %2346 = vmatprep.subr.bf16.mxu0 %v2079
    %2347 = vmatpush1.bf16.msra.mxu0 %v2078
    %2348 = vmatprep.subr.bf16.mxu0 %v2082
    %2349 = vmatpush1.bf16.msra.mxu0 %v2081
    %2350 = vmatprep.subr.bf16.mxu0 %v2085
    %2351 = vmatpush1.bf16.msra.mxu0 %v2084
    %2352 = vmatprep.mubr.bf16.mxu0 %v101
    %2353 = vmatmul.mubr.bf16.gmra.mrb[0].mxu0 %v100
    %v2354 = vpop.f32.mrb[0].mxu0
    %v2355 = vadd.f32 %v2314, %v2354
    %v2356 = vpop.f32.mrb[0].mxu0
    %v2357 = vadd.f32 %v2316, %v2356
    %v2358 = vpop.f32.mrb[0].mxu0
    %v2359 = vpop.f32.mrb[0].mxu0
    %2360 = vdwg.mxu0
    %2361 = vmatprep.subr.bf16.mxu0 %v2088
    %2362 = vmatpush1.bf16.msra.mxu0 %v2087
    %2363 = vmatprep.subr.bf16.mxu0 %v2091
    %2364 = vmatpush1.bf16.msra.mxu0 %v2090
    %2365 = vmatprep.subr.bf16.mxu0 %v2094
    %2366 = vmatpush1.bf16.msra.mxu0 %v2093
    %2367 = vmatprep.subr.bf16.mxu0 %v2097
    %2368 = vmatpush1.bf16.msra.mxu0 %v2096
    %2369 = vmatprep.subr.bf16.mxu0 %v2100
    %2370 = vmatpush1.bf16.msra.mxu0 %v2099
    %2371 = vmatprep.subr.bf16.mxu0 %v2103
    %2372 = vmatpush1.bf16.msra.mxu0 %v2102
    %2373 = vmatprep.subr.bf16.mxu0 %v2106
    %2374 = vmatpush1.bf16.msra.mxu0 %v2105
    %2375 = vmatprep.subr.bf16.mxu0 %v2109
    %2376 = vmatpush1.bf16.msra.mxu0 %v2108
    %2377 = vmatprep.subr.bf16.mxu0 %v2112
    %2378 = vmatpush1.bf16.msra.mxu0 %v2111
    %2379 = vmatprep.subr.bf16.mxu0 %v2115
    %2380 = vmatpush1.bf16.msra.mxu0 %v2114
    %2381 = vmatprep.subr.bf16.mxu0 %v2118
    %2382 = vmatpush1.bf16.msra.mxu0 %v2117
    %2383 = vmatprep.subr.bf16.mxu0 %v2121
    %2384 = vmatpush1.bf16.msra.mxu0 %v2120
    %2385 = vmatprep.subr.bf16.mxu0 %v2124
    %2386 = vmatpush1.bf16.msra.mxu0 %v2123
    %2387 = vmatprep.subr.bf16.mxu0 %v2127
    %2388 = vmatpush1.bf16.msra.mxu0 %v2126
    %2389 = vmatprep.subr.bf16.mxu0 %v2130
    %2390 = vmatpush1.bf16.msra.mxu0 %v2129
    %2391 = vmatprep.subr.bf16.mxu0 %v2133
    %2392 = vmatpush1.bf16.msra.mxu0 %v2132
    %2393 = vmatprep.mubr.bf16.mxu0 %v103
    %2394 = vmatmul.mubr.bf16.gmra.mrb[0].mxu0 %v102
    %v2395 = vpop.f32.mrb[0].mxu0
    %v2396 = vadd.f32 %v2355, %v2395
    %v2397 = vpop.f32.mrb[0].mxu0
    %v2398 = vadd.f32 %v2357, %v2397
    %v2399 = vpop.f32.mrb[0].mxu0
    %v2400 = vpop.f32.mrb[0].mxu0
    %2401 = vdwg.mxu0
    %2402 = vmatprep.subr.bf16.mxu0 0
    %2403 = vmatpush1.bf16.msra.mxu0 %v1993
    %2404 = vmatprep.subr.bf16.mxu0 0
    %2405 = vmatpush1.bf16.msra.mxu0 %v1996
    %2406 = vmatprep.subr.bf16.mxu0 0
    %2407 = vmatpush1.bf16.msra.mxu0 %v1999
    %2408 = vmatprep.subr.bf16.mxu0 0
    %2409 = vmatpush1.bf16.msra.mxu0 %v2002
    %2410 = vmatprep.subr.bf16.mxu0 0
    %2411 = vmatpush1.bf16.msra.mxu0 %v2005
    %2412 = vmatprep.subr.bf16.mxu0 0
    %2413 = vmatpush1.bf16.msra.mxu0 %v2008
    %2414 = vmatprep.subr.bf16.mxu0 0
    %2415 = vmatpush1.bf16.msra.mxu0 %v2011
    %2416 = vmatprep.subr.bf16.mxu0 0
    %2417 = vmatpush1.bf16.msra.mxu0 %v2014
    %2418 = vmatprep.subr.bf16.mxu0 0
    %2419 = vmatpush1.bf16.msra.mxu0 %v2017
    %2420 = vmatprep.subr.bf16.mxu0 0
    %2421 = vmatpush1.bf16.msra.mxu0 %v2020
    %2422 = vmatprep.subr.bf16.mxu0 0
    %2423 = vmatpush1.bf16.msra.mxu0 %v2023
    %2424 = vmatprep.subr.bf16.mxu0 0
    %2425 = vmatpush1.bf16.msra.mxu0 %v2026
    %2426 = vmatprep.subr.bf16.mxu0 0
    %2427 = vmatpush1.bf16.msra.mxu0 %v2029
    %2428 = vmatprep.subr.bf16.mxu0 0
    %2429 = vmatpush1.bf16.msra.mxu0 %v2032
    %2430 = vmatprep.subr.bf16.mxu0 0
    %2431 = vmatpush1.bf16.msra.mxu0 %v2035
    %2432 = vmatprep.subr.bf16.mxu0 0
    %2433 = vmatpush1.bf16.msra.mxu0 %v2038
    %2434 = vmatprep.mubr.bf16.mxu0 %v99
    %2435 = vmatmul.mubr.bf16.gmra.mrb[0].mxu0 %v98
    %v2436 = vpop.f32.mrb[0].mxu0
    %v2437 = vadd.f32 %v1506, %v2436
    %v2438 = vpop.f32.mrb[0].mxu0
    %v2439 = vpop.f32.mrb[0].mxu0
    %v2440 = vpop.f32.mrb[0].mxu0
    %2441 = vdwg.mxu0
    %2442 = vmatprep.subr.bf16.mxu0 0
    %2443 = vmatpush1.bf16.msra.mxu0 %v2041
    %2444 = vmatprep.subr.bf16.mxu0 0
    %2445 = vmatpush1.bf16.msra.mxu0 %v2044
    %2446 = vmatprep.subr.bf16.mxu0 0
    %2447 = vmatpush1.bf16.msra.mxu0 %v2047
    %2448 = vmatprep.subr.bf16.mxu0 0
    %2449 = vmatpush1.bf16.msra.mxu0 %v2050
    %2450 = vmatprep.subr.bf16.mxu0 0
    %2451 = vmatpush1.bf16.msra.mxu0 %v2053
    %2452 = vmatprep.subr.bf16.mxu0 0
    %2453 = vmatpush1.bf16.msra.mxu0 %v2056
    %2454 = vmatprep.subr.bf16.mxu0 0
    %2455 = vmatpush1.bf16.msra.mxu0 %v2059
    %2456 = vmatprep.subr.bf16.mxu0 0
    %2457 = vmatpush1.bf16.msra.mxu0 %v2062
    %2458 = vmatprep.subr.bf16.mxu0 0
    %2459 = vmatpush1.bf16.msra.mxu0 %v2065
    %2460 = vmatprep.subr.bf16.mxu0 0
    %2461 = vmatpush1.bf16.msra.mxu0 %v2068
    %2462 = vmatprep.subr.bf16.mxu0 0
    %2463 = vmatpush1.bf16.msra.mxu0 %v2071
    %2464 = vmatprep.subr.bf16.mxu0 0
    %2465 = vmatpush1.bf16.msra.mxu0 %v2074
    %2466 = vmatprep.subr.bf16.mxu0 0
    %2467 = vmatpush1.bf16.msra.mxu0 %v2077
    %2468 = vmatprep.subr.bf16.mxu0 0
    %2469 = vmatpush1.bf16.msra.mxu0 %v2080
    %2470 = vmatprep.subr.bf16.mxu0 0
    %2471 = vmatpush1.bf16.msra.mxu0 %v2083
    %2472 = vmatprep.subr.bf16.mxu0 0
    %2473 = vmatpush1.bf16.msra.mxu0 %v2086
    %2474 = vmatprep.mubr.bf16.mxu0 %v101
    %2475 = vmatmul.mubr.bf16.gmra.mrb[0].mxu0 %v100
    %v2476 = vpop.f32.mrb[0].mxu0
    %v2477 = vadd.f32 %v2437, %v2476
    %v2478 = vpop.f32.mrb[0].mxu0
    %v2479 = vpop.f32.mrb[0].mxu0
    %v2480 = vpop.f32.mrb[0].mxu0
    %2481 = vdwg.mxu0
    %2482 = vmatprep.subr.bf16.mxu0 0
    %2483 = vmatpush1.bf16.msra.mxu0 %v2089
    %2484 = vmatprep.subr.bf16.mxu0 0
    %2485 = vmatpush1.bf16.msra.mxu0 %v2092
    %2486 = vmatprep.subr.bf16.mxu0 0
    %2487 = vmatpush1.bf16.msra.mxu0 %v2095
    %2488 = vmatprep.subr.bf16.mxu0 0
    %2489 = vmatpush1.bf16.msra.mxu0 %v2098
    %2490 = vmatprep.subr.bf16.mxu0 0
    %2491 = vmatpush1.bf16.msra.mxu0 %v2101
    %2492 = vmatprep.subr.bf16.mxu0 0
    %2493 = vmatpush1.bf16.msra.mxu0 %v2104
    %2494 = vmatprep.subr.bf16.mxu0 0
    %2495 = vmatpush1.bf16.msra.mxu0 %v2107
    %2496 = vmatprep.subr.bf16.mxu0 0
    %2497 = vmatpush1.bf16.msra.mxu0 %v2110
    %2498 = vmatprep.subr.bf16.mxu0 0
    %2499 = vmatpush1.bf16.msra.mxu0 %v2113
    %2500 = vmatprep.subr.bf16.mxu0 0
    %2501 = vmatpush1.bf16.msra.mxu0 %v2116
    %2502 = vmatprep.subr.bf16.mxu0 0
    %2503 = vmatpush1.bf16.msra.mxu0 %v2119
    %2504 = vmatprep.subr.bf16.mxu0 0
    %2505 = vmatpush1.bf16.msra.mxu0 %v2122
    %2506 = vmatprep.subr.bf16.mxu0 0
    %2507 = vmatpush1.bf16.msra.mxu0 %v2125
    %2508 = vmatprep.subr.bf16.mxu0 0
    %2509 = vmatpush1.bf16.msra.mxu0 %v2128
    %2510 = vmatprep.subr.bf16.mxu0 0
    %2511 = vmatpush1.bf16.msra.mxu0 %v2131
    %2512 = vmatprep.subr.bf16.mxu0 0
    %2513 = vmatpush1.bf16.msra.mxu0 %v2134
    %2514 = vmatprep.mubr.bf16.mxu0 %v103
    %2515 = vmatmul.mubr.bf16.gmra.mrb[0].mxu0 %v102
    %v2516 = vpop.f32.mrb[0].mxu0
    %v2517 = vadd.f32 %v2477, %v2516
    %v2518 = vpop.f32.mrb[0].mxu0
    %v2519 = vpop.f32.mrb[0].mxu0
    %v2520 = vpop.f32.mrb[0].mxu0
    %2521 = vdwg.mxu0
    %v2522 = vld [vmem:[%s4] sm:$0x7]
    %v2524 = vlaneseq
    %v2525 = vshrl.u32 %v2524, 7
    %v2526 = vsub.s32 0, %v2525
    %v2527 = vrot.slane %v2522, %v2526
    %v2528 = vlaneseq
    %v2529 = vshrl.u32 %v2528, 7
    %v2530 = vsub.s32 1, %v2529
    %v2531 = vrot.slane %v2522, %v2530
    %v2532 = vlaneseq
    %v2533 = vshrl.u32 %v2532, 7
    %v2534 = vsub.s32 2, %v2533
    %v2535 = vrot.slane %v2522, %v2534
    %v2539 = vadd.f32 %v2396, %v2527
    %v2540 = vadd.f32 %v2398, %v2531
    %v2541 = vadd.f32 %v2517, %v2535
    %v2542 = vmax.f32 %v2539, 0.0
    %v2543 = vmax.f32 %v2540, 0.0
    %v2544 = vmax.f32 %v2541, 0.0
    %v2545 = vpack.c.bf16 %v2542, %v2542
    %v2546 = vpack.c.bf16 %v2543, %v2543
    %v2547 = vpack.c.bf16 %v2544, %v2544
    %v2548 = vld [vmem:[#allocation10] sm:$0xf]
    %v2549 = vld [vmem:[#allocation10 + $0x4] sm:$0xf]
    %v2550 = vld [vmem:[#allocation10 + $0x8] sm:$0xf]
    %v2551 = vld [vmem:[#allocation10 + $0xc] sm:$0xf]
    %v2552 = vld [vmem:[#allocation10 + $0x10] sm:$0xf]
    %v2553 = vld [vmem:[#allocation10 + $0x14] sm:$0xf]
    %v2554 = vld [vmem:[#allocation10 + $0x18] sm:$0xf]
    %v2555 = vld [vmem:[#allocation10 + $0x1c] sm:$0xf]
    %v2556 = vld [vmem:[#allocation10 + $0x20] sm:$0xf]
    %v2557 = vld [vmem:[#allocation10 + $0x24] sm:$0xf]
    %v2558 = vld [vmem:[#allocation10 + $0x28] sm:$0xf]
    %v2559 = vld [vmem:[#allocation10 + $0x2c] sm:$0xf]
    %v2560 = vld [vmem:[#allocation10 + $0x30] sm:$0xf]
    %v2561 = vld [vmem:[#allocation10 + $0x34] sm:$0xf]
    %v2562 = vld [vmem:[#allocation10 + $0x38] sm:$0xf]
    %v2563 = vld [vmem:[#allocation10 + $0x3c] sm:$0xf]
    %v2564 = vld [vmem:[#allocation10 + $0x40] sm:$0xf]
    %v2565 = vld [vmem:[#allocation10 + $0x44] sm:$0xf]
    %v2566 = vld [vmem:[#allocation10 + $0x48] sm:$0xf]
    %v2567 = vld [vmem:[#allocation10 + $0x4c] sm:$0xf]
    %v2568 = vld [vmem:[#allocation10 + $0x50] sm:$0xf]
    %v2569 = vld [vmem:[#allocation10 + $0x54] sm:$0xf]
    %v2570 = vld [vmem:[#allocation10 + $0x58] sm:$0xf]
    %v2571 = vld [vmem:[#allocation10 + $0x5c] sm:$0xf]
    %v2572 = vld [vmem:[#allocation10 + $0x60] sm:$0xf]
    %v2573 = vld [vmem:[#allocation10 + $0x64] sm:$0xf]
    %v2574 = vld [vmem:[#allocation10 + $0x68] sm:$0xf]
    %v2575 = vld [vmem:[#allocation10 + $0x6c] sm:$0xf]
    %v2576 = vld [vmem:[#allocation10 + $0x70] sm:$0xf]
    %v2577 = vld [vmem:[#allocation10 + $0x74] sm:$0xf]
    %v2578 = vld [vmem:[#allocation10 + $0x78] sm:$0xf]
    %v2579 = vld [vmem:[#allocation10 + $0x7c] sm:$0xf]
    %v2580 = vld [vmem:[#allocation10 + $0x80] sm:$0xf]
    %v2581 = vld [vmem:[#allocation10 + $0x84] sm:$0xf]
    %v2582 = vld [vmem:[#allocation10 + $0x88] sm:$0xf]
    %v2583 = vld [vmem:[#allocation10 + $0x8c] sm:$0xf]
    %v2584 = vld [vmem:[#allocation10 + $0x90] sm:$0xf]
    %v2585 = vld [vmem:[#allocation10 + $0x94] sm:$0xf]
    %v2586 = vld [vmem:[#allocation10 + $0x98] sm:$0xf]
    %v2587 = vld [vmem:[#allocation10 + $0x9c] sm:$0xf]
    %v2588 = vld [vmem:[#allocation10 + $0xa0] sm:$0xf]
    %v2589 = vld [vmem:[#allocation10 + $0xa4] sm:$0xf]
    %v2590 = vld [vmem:[#allocation10 + $0xa8] sm:$0xf]
    %v2591 = vld [vmem:[#allocation10 + $0xac] sm:$0xf]
    %v2592 = vld [vmem:[#allocation10 + $0xb0] sm:$0xf]
    %v2593 = vld [vmem:[#allocation10 + $0xb4] sm:$0xf]
    %v2594 = vld [vmem:[#allocation10 + $0xb8] sm:$0xf]
    %v2595 = vld [vmem:[#allocation10 + $0xbc] sm:$0xf]
    %v2596 = vld [vmem:[%s6] sm:$0x1]
    %v2598 = vlaneseq
    %v2599 = vshrl.u32 %v2598, 7
    %v2600 = vsub.s32 0, %v2599
    %v2601 = vrot.slane %v2596, %v2600
    %v2651 = vunpack.c.l.b16 %v2548
    %v2652 = vunpack.c.l.b16 %v2549
    %v2653 = vunpack.c.l.b16 %v2550
    %v2654 = vunpack.c.l.b16 %v2551
    %v2655 = vunpack.c.l.b16 %v2552
    %v2656 = vunpack.c.l.b16 %v2553
    %v2657 = vunpack.c.l.b16 %v2554
    %v2658 = vunpack.c.l.b16 %v2555
    %v2659 = vunpack.c.l.b16 %v2556
    %v2660 = vunpack.c.l.b16 %v2557
    %v2661 = vunpack.c.l.b16 %v2558
    %v2662 = vunpack.c.l.b16 %v2559
    %v2663 = vunpack.c.l.b16 %v2560
    %v2664 = vunpack.c.l.b16 %v2561
    %v2665 = vunpack.c.l.b16 %v2562
    %v2666 = vunpack.c.l.b16 %v2563
    %v2667 = vunpack.c.l.b16 %v2564
    %v2668 = vunpack.c.l.b16 %v2565
    %v2669 = vunpack.c.l.b16 %v2566
    %v2670 = vunpack.c.l.b16 %v2567
    %v2671 = vunpack.c.l.b16 %v2568
    %v2672 = vunpack.c.l.b16 %v2569
    %v2673 = vunpack.c.l.b16 %v2570
    %v2674 = vunpack.c.l.b16 %v2571
    %v2675 = vunpack.c.l.b16 %v2572
    %v2676 = vunpack.c.l.b16 %v2573
    %v2677 = vunpack.c.l.b16 %v2574
    %v2678 = vunpack.c.l.b16 %v2575
    %v2679 = vunpack.c.l.b16 %v2576
    %v2680 = vunpack.c.l.b16 %v2577
    %v2681 = vunpack.c.l.b16 %v2578
    %v2682 = vunpack.c.l.b16 %v2579
    %v2683 = vunpack.c.l.b16 %v2580
    %v2684 = vunpack.c.l.b16 %v2581
    %v2685 = vunpack.c.l.b16 %v2582
    %v2686 = vunpack.c.l.b16 %v2583
    %v2687 = vunpack.c.l.b16 %v2584
    %v2688 = vunpack.c.l.b16 %v2585
    %v2689 = vunpack.c.l.b16 %v2586
    %v2690 = vunpack.c.l.b16 %v2587
    %v2691 = vunpack.c.l.b16 %v2588
    %v2692 = vunpack.c.l.b16 %v2589
    %v2693 = vunpack.c.l.b16 %v2590
    %v2694 = vunpack.c.l.b16 %v2591
    %v2695 = vunpack.c.l.b16 %v2592
    %v2696 = vunpack.c.l.b16 %v2593
    %v2697 = vunpack.c.l.b16 %v2594
    %v2698 = vunpack.c.l.b16 %v2595
    %v2699 = vpack.c.b16 %v2652, %v2651
    %v2700 = vpack.c.b16 %v2654, %v2653
    %v2701 = vpack.c.b16 %v2656, %v2655
    %v2702 = vpack.c.b16 %v2658, %v2657
    %v2703 = vpack.c.b16 %v2660, %v2659
    %v2704 = vpack.c.b16 %v2662, %v2661
    %v2705 = vpack.c.b16 %v2664, %v2663
    %v2706 = vpack.c.b16 %v2666, %v2665
    %v2707 = vpack.c.b16 %v2668, %v2667
    %v2708 = vpack.c.b16 %v2670, %v2669
    %v2709 = vpack.c.b16 %v2672, %v2671
    %v2710 = vpack.c.b16 %v2674, %v2673
    %v2711 = vpack.c.b16 %v2676, %v2675
    %v2712 = vpack.c.b16 %v2678, %v2677
    %v2713 = vpack.c.b16 %v2680, %v2679
    %v2714 = vpack.c.b16 %v2682, %v2681
    %v2715 = vpack.c.b16 %v2684, %v2683
    %v2716 = vpack.c.b16 %v2686, %v2685
    %v2717 = vpack.c.b16 %v2688, %v2687
    %v2718 = vpack.c.b16 %v2690, %v2689
    %v2719 = vpack.c.b16 %v2692, %v2691
    %v2720 = vpack.c.b16 %v2694, %v2693
    %v2721 = vpack.c.b16 %v2696, %v2695
    %v2722 = vpack.c.b16 %v2698, %v2697
    %2747 = vmatprep.subr.bf16.mxu0 0
    %2748 = vmatpush1.bf16.msra.mxu0 %v2699
    %2749 = vmatprep.subr.bf16.mxu0 0
    %2750 = vmatpush1.bf16.msra.mxu0 %v2700
    %2751 = vmatprep.subr.bf16.mxu0 0
    %2752 = vmatpush1.bf16.msra.mxu0 %v2701
    %2753 = vmatprep.subr.bf16.mxu0 0
    %2754 = vmatpush1.bf16.msra.mxu0 %v2702
    %2755 = vmatprep.subr.bf16.mxu0 0
    %2756 = vmatpush1.bf16.msra.mxu0 %v2703
    %2757 = vmatprep.subr.bf16.mxu0 0
    %2758 = vmatpush1.bf16.msra.mxu0 %v2704
    %2759 = vmatprep.subr.bf16.mxu0 0
    %2760 = vmatpush1.bf16.msra.mxu0 %v2705
    %2761 = vmatprep.subr.bf16.mxu0 0
    %2762 = vmatpush1.bf16.msra.mxu0 %v2706
    %2763 = vmatprep.subr.bf16.mxu0 0
    %2764 = vmatpush1.bf16.msra.mxu0 %v2707
    %2765 = vmatprep.subr.bf16.mxu0 0
    %2766 = vmatpush1.bf16.msra.mxu0 %v2708
    %2767 = vmatprep.subr.bf16.mxu0 0
    %2768 = vmatpush1.bf16.msra.mxu0 %v2709
    %2769 = vmatprep.subr.bf16.mxu0 0
    %2770 = vmatpush1.bf16.msra.mxu0 %v2710
    %2771 = vmatprep.subr.bf16.mxu0 0
    %2772 = vmatpush1.bf16.msra.mxu0 %v2711
    %2773 = vmatprep.subr.bf16.mxu0 0
    %2774 = vmatpush1.bf16.msra.mxu0 %v2712
    %2775 = vmatprep.subr.bf16.mxu0 0
    %2776 = vmatpush1.bf16.msra.mxu0 %v2713
    %2777 = vmatprep.subr.bf16.mxu0 0
    %2778 = vmatpush1.bf16.msra.mxu0 %v2714
    %2779 = vmatprep.mubr.bf16.mxu0 %v2546
    %2780 = vmatmul.mubr.bf16.gmra.mrb[0].mxu0 %v2545
    %v2781 = vpop.f32.mrb[0].mxu0
    %v2782 = vadd.f32 %v2601, %v2781
    %v2783 = vpop.f32.mrb[0].mxu0
    %v2784 = vpop.f32.mrb[0].mxu0
    %v2785 = vpop.f32.mrb[0].mxu0
    %2786 = vdwg.mxu0
    %2787 = vmatprep.subr.bf16.mxu0 0
    %2788 = vmatpush1.bf16.msra.mxu0 %v2715
    %2789 = vmatprep.subr.bf16.mxu0 0
    %2790 = vmatpush1.bf16.msra.mxu0 %v2716
    %2791 = vmatprep.subr.bf16.mxu0 0
    %2792 = vmatpush1.bf16.msra.mxu0 %v2717
    %2793 = vmatprep.subr.bf16.mxu0 0
    %2794 = vmatpush1.bf16.msra.mxu0 %v2718
    %2795 = vmatprep.subr.bf16.mxu0 0
    %2796 = vmatpush1.bf16.msra.mxu0 %v2719
    %2797 = vmatprep.subr.bf16.mxu0 0
    %2798 = vmatpush1.bf16.msra.mxu0 %v2720
    %2799 = vmatprep.subr.bf16.mxu0 0
    %2800 = vmatpush1.bf16.msra.mxu0 %v2721
    %2801 = vmatprep.subr.bf16.mxu0 0
    %2802 = vmatpush1.bf16.msra.mxu0 %v2722
    %2803 = vmatprep.subr.bf16.mxu0 0
    %2804 = vmatpush1.bf16.msra.mxu0 0
    %2805 = vmatprep.subr.bf16.mxu0 0
    %2806 = vmatpush1.bf16.msra.mxu0 0
    %2807 = vmatprep.subr.bf16.mxu0 0
    %2808 = vmatpush1.bf16.msra.mxu0 0
    %2809 = vmatprep.subr.bf16.mxu0 0
    %2810 = vmatpush1.bf16.msra.mxu0 0
    %2811 = vmatprep.subr.bf16.mxu0 0
    %2812 = vmatpush1.bf16.msra.mxu0 0
    %2813 = vmatprep.subr.bf16.mxu0 0
    %2814 = vmatpush1.bf16.msra.mxu0 0
    %2815 = vmatprep.subr.bf16.mxu0 0
    %2816 = vmatpush1.bf16.msra.mxu0 0
    %2817 = vmatprep.subr.bf16.mxu0 0
    %2818 = vmatpush1.bf16.msra.mxu0 0
    %2819 = vmatprep.mubr.bf16.mxu0 0
    %2820 = vmatmul.mubr.bf16.gmra.mrb[0].mxu0 %v2547
    %v2821 = vpop.f32.mrb[0].mxu0
    %v2822 = vadd.f32 %v2782, %v2821
    %v2823 = vpop.f32.mrb[0].mxu0
    %v2824 = vpop.f32.mrb[0].mxu0
    %v2825 = vpop.f32.mrb[0].mxu0
    %2826 = vdwg.mxu0
    %v2827 = vxor.u32 %v2822, 2147483648
    %v2828 = vmul.f32 %v2827, 1.442695
    %v2829 = vpow.pop %v2828
    %v2830 = vadd.f32 %v2829, 1.0
    %v2831 = vrcp.pop %v2830
    %v2832 = vmul.f32 1.0, %v2831
    %v2833 = vpack.c.bf16 %v2832, %v2832
    %2834 = vst [vmem:[#allocation11] sm:$0xf] %v2833
    // Predicated region
    $region50: #{tpu_custom_call.1} parent=1 // pred_check
      _
    $region51: #{tpu_custom_call.1} parent=1 // pred_check_branch
      %2836 = sbr.rel (0) target = $region53
    $region52: #{tpu_custom_call.1} parent=1 // pred_region
      %s2838 = ssub.s32 64, 64
      %2839 = vsyncadd [#allocation4], %s2838
      %s2841 = sshll.u32 [#allocation11], 4
      %s2842 = int_to_ptr.vmem [resolvable:$true] %s2841
      %2844 = dma.vmem_to_hbm [thread:$0]  %s2842, 64, %s7, [#allocation4]
    $region53: #{tpu_custom_call.1} parent=1 // pred_fallthru
      _
    // Predicated region
    $region54: #{tpu_custom_call.1} parent=1 // pred_check
      _
    $region55: #{tpu_custom_call.1} parent=1 // pred_check_branch
      %2846 = sbr.rel (0) target = $region57
    $region56: #{tpu_custom_call.1} parent=1 // pred_region
      %2847 = dma.done [#allocation4], 64
    $region57: #{tpu_custom_call.1} parent=1 // pred_fallthru
      _
    %2848 = vsyncpa [#allocation3], 1
    %2849 = vsyncpa [#allocation6], 1
    %2850 = vsyncpa [#allocation9], 1
    %2851 = vsyncpa [#allocation4], 1

</llo_original>
